<compile_context>
chip_gen: v5e
topology: v5e:2x2
jax: 0.10.0
libtpu: 0.0.40
codegen_flags: <defaults>
</compile_context>

<pallas_src>
import functools

import jax
import jax.numpy as jnp
from jax.experimental import pallas as pl
from jax.experimental.pallas import tpu as pltpu


# bf16 operands (f32 accumulation) for the per-step h @ W_hh matmul on the serial chain.
MATMUL_DTYPE = jnp.bfloat16


def _t2v_lstm_kernel(x_ref,     # (S*BP, 1) f32  time-major input column, row = s*BP + b
                     slab_ref,  # (8, 4D)  f32   packed small params (see wrapper packing)
                     w_ref,     # (3D, 4D) f32   [W_ih^T ; W_hh^T ; W_fc^T zero-padded] row blocks
                     out_ref,   # (BP, 3)  f32   softmax probs (rows >= true batch are junk)
                     *, seq_len, time_dim):
    S = seq_len
    D = time_dim
    G = 4 * D
    BP = out_ref.shape[0]

    # ---- unpack packed params (one slab DMA instead of five small ones) -----------
    # CONTRACT (set up by the wrapper): the i/f/o gate columns of wih / whh / bl are
    # pre-scaled by 0.5 so that sigmoid(z) == 0.5*tanh(scaled_gate) + 0.5.
    wt = slab_ref[0:1, 0:D]        # (1, D)  Time2Vec weights (cols 0..D-2 periodic, D-1 linear)
    bt = slab_ref[1:2, 0:D]        # (1, D)  Time2Vec biases
    bl = slab_ref[2:3, :]          # (1, 4D) LSTM bias (b_ih + b_hh), gate order [i, f, g, o]
    bfc = slab_ref[3:4, 0:3]       # (1, 3)  final Linear bias

    wih = w_ref[0:D, :]                               # (D, 4D) f32  (off critical path)
    whh = w_ref[D:2 * D, :].astype(MATMUL_DTYPE)      # (D, 4D) bf16 (hot-loop RHS, cast once)
    wfc = w_ref[2 * D:3 * D, :]                       # (D, 4D) f32, only cols [0,3) nonzero

    # ---- hoisted Time2Vec featurization over all timesteps ------------------------
    tau = x_ref[...]                                          # (S*BP, 1)
    pre = tau * wt + bt                                       # (S*BP, D)
    lane_d = jax.lax.broadcasted_iota(jnp.int32, pre.shape, 1)
    feat = jnp.where(lane_d < D - 1, jnp.sin(pre), pre)       # sin features + last linear col

    # ---- hoisted input projection + bias: one (S*BP, D) x (D, 4D) matmul ----------
    xp = jnp.dot(feat, wih, preferred_element_type=jnp.float32) + bl    # (S*BP, 4D)

    # Gate affine fixup (hoisted): act = tanh(gates) * gate_mul + gate_add gives
    # [sigmoid(i) | sigmoid(f) | tanh(g) | sigmoid(o)] lanes in one EUP pass per step.
    lane_g = jax.lax.broadcasted_iota(jnp.int32, (1, G), 1)
    is_g = (lane_g >= 2 * D) & (lane_g < 3 * D)
    gate_mul = jnp.where(is_g, 1.0, 0.5).astype(jnp.float32)  # (1, 4D)
    gate_add = jnp.where(is_g, 0.0, 0.5).astype(jnp.float32)  # (1, 4D)

    h = jnp.zeros((BP, D), jnp.float32)
    c = jnp.zeros((BP, D), jnp.float32)

    # ---- recurrence: statically unrolled, K=D contraction, bf16 MXU operands ------
    for t in range(S):
        gates = xp[t * BP:(t + 1) * BP, :] + jnp.dot(
            h.astype(MATMUL_DTYPE), whh, preferred_element_type=jnp.float32)   # (BP, 4D)
        act = jnp.tanh(gates) * gate_mul + gate_add
        i_g = act[:, 0:D]
        f_g = act[:, D:2 * D]
        g_g = act[:, 2 * D:3 * D]
        o_g = act[:, 3 * D:4 * D]
        c = f_g * c + i_g * g_g
        h = o_g * jnp.tanh(c)

    # ---- epilogue: Linear(D, 3) + EXACT softmax ------------------------------------
    # wfc is zero beyond column 3, so the wide dot's extra lanes are just ignored.
    logits = jnp.dot(h, wfc, preferred_element_type=jnp.float32)[:, 0:3] + bfc   # (BP, 3)
    m = jnp.max(logits, axis=1, keepdims=True)
    e = jnp.exp(logits - m)
    out_ref[...] = e / jnp.sum(e, axis=1, keepdims=True)


@jax.jit
def t2v_lstm_forward(x, params):
    """x: (B, S, 1) float32; returns (B, 3) softmax probabilities."""
    B, S, _ = x.shape
    D = params["wt"].shape[1]
    G = 4 * D
    BP = ((B + 7) // 8) * 8            # pad batch to the 8-sublane boundary

    # Time-major, sublane-padded input column: row s*BP + b <-> (seq s, batch b).
    x_t = jnp.transpose(x, (1, 0, 2)).reshape(S, B).astype(jnp.float32)
    x_pad = jnp.zeros((S, BP), jnp.float32).at[:, :B].set(x_t)
    x_col = x_pad.reshape(S * BP, 1)

    # Fold sigmoid(z) = 0.5*tanh(z/2) + 0.5 pre-scale into the i/f/o gate columns
    # (exact: power-of-two scale).  The kernel then needs ONE tanh per step.
    col = jnp.arange(G)
    is_g_col = (col >= 2 * D) & (col < 3 * D)
    gate_scale = jnp.where(is_g_col, 1.0, 0.5).astype(jnp.float32)    # (4D,)
    wih_s = params["wih_t"] * gate_scale[None, :]
    whh_s = params["whh_t"] * gate_scale[None, :]
    bl_s = params["b_lstm"] * gate_scale[None, :]

    # Pack the small vectors into one (8, 4D) f32 slab (fewer prologue DMAs).
    slab = jnp.zeros((8, G), jnp.float32)
    slab = slab.at[0, :D].set(params["wt"][0])
    slab = slab.at[1, :D].set(params["bt"][0])
    slab = slab.at[2, :].set(bl_s[0])
    slab = slab.at[3, :3].set(params["bfc"][0])

    # Stack the three weight matrices into a single (3D, 4D) f32 buffer.
    wfc_pad = jnp.zeros((D, G), jnp.float32).at[:, :3].set(params["wfc_t"])
    w_stack = jnp.concatenate([wih_s, whh_s, wfc_pad], axis=0)

    vmem = pl.BlockSpec(memory_space=pltpu.MemorySpace.VMEM)
    out = pl.pallas_call(
        functools.partial(_t2v_lstm_kernel, seq_len=S, time_dim=D),
        out_shape=jax.ShapeDtypeStruct((BP, 3), jnp.float32),
        in_specs=[vmem, vmem, vmem],
        out_specs=vmem,
        # No grid: footprint ~80 KiB, latency-bound on the serial recurrence at B=2.
    )(x_col, slab, w_stack)
    return out[:B]


def init_params(key, time_dim):
    """Deterministic synthetic parameters matching the PyTorch module's shapes."""
    D = time_dim
    ks = jax.random.split(key, 10)

    # SineActivation(1, D): w (1, D-1), b (D-1,), w0 (1, 1), b0 (1,)
    w = jax.random.normal(ks[0], (1, D - 1), jnp.float32)
    b = jax.random.normal(ks[1], (D - 1,), jnp.float32)
    w0 = jax.random.normal(ks[2], (1, 1), jnp.float32)
    b0 = jax.random.normal(ks[3], (1,), jnp.float32)
    wt = jnp.concatenate([w, w0], axis=1)                    # (1, D)
    bt = jnp.concatenate([b, b0])[None, :]                   # (1, D)

    # nn.LSTM(D, D): weight_ih (4D, D), weight_hh (4D, D), biases (4D,), gate order [i,f,g,o]
    s = 1.0 / jnp.sqrt(jnp.float32(D))
    wih = jax.random.uniform(ks[4], (4 * D, D), jnp.float32, -s, s)
    whh = jax.random.uniform(ks[5], (4 * D, D), jnp.float32, -s, s)
    bih = jax.random.uniform(ks[6], (4 * D,), jnp.float32, -s, s)
    bhh = jax.random.uniform(ks[7], (4 * D,), jnp.float32, -s, s)

    # nn.Linear(D, 3): weight (3, D), bias (3,)
    wfc = jax.random.uniform(ks[8], (3, D), jnp.float32, -s, s)
    bfc = jax.random.uniform(ks[9], (3,), jnp.float32, -s, s)

    return {
        "wt": wt, "bt": bt,
        "wih_t": wih.T, "whh_t": whh.T,
        "b_lstm": (bih + bhh)[None, :],
        "wfc_t": wfc.T, "bfc": bfc[None, :],
    }


def reference_forward(x, params):
    """Pure-JAX f32 reference of the PyTorch forward, for correctness checking."""
    B, S, _ = x.shape
    D = params["wt"].shape[1]
    pre = x * params["wt"][None, :, :] + params["bt"][None, :, :]       # (B, S, D)
    mask = jnp.arange(D) < D - 1
    feat = jnp.where(mask, jnp.sin(pre), pre)

    def step(carry, xt):
        h, c = carry
        gates = xt @ params["wih_t"] + h @ params["whh_t"] + params["b_lstm"]
        i_g = jax.nn.sigmoid(gates[:, 0:D])
        f_g = jax.nn.sigmoid(gates[:, D:2 * D])
        g_g = jnp.tanh(gates[:, 2 * D:3 * D])
        o_g = jax.nn.sigmoid(gates[:, 3 * D:4 * D])
        c = f_g * c + i_g * g_g
        h = o_g * jnp.tanh(c)
        return (h, c), None

    h0 = jnp.zeros((B, D), jnp.float32)
    c0 = jnp.zeros((B, D), jnp.float32)
    (h, _), _ = jax.lax.scan(step, (h0, c0), jnp.transpose(feat, (1, 0, 2)))
    logits = h @ params["wfc_t"] + params["bfc"]
    return jax.nn.softmax(logits, axis=1)


if __name__ == "__main__":
    B, S, TIME_DIM = 2, 8, 32

    key = jax.random.PRNGKey(0)
    k_x, k_p = jax.random.split(key)
    x = jax.random.normal(k_x, (B, S, 1), jnp.float32)       # (batch, seq, 1), batch_first
    params = init_params(k_p, TIME_DIM)

    out = jax.block_until_ready(t2v_lstm_forward(x, params))
    ref = reference_forward(x, params)

    assert out.shape == (B, 3)
    assert bool(jnp.all(jnp.isfinite(out)))
    # Exact softmax divide in the kernel -> row sums are 1 to f32 rounding.
    assert bool(jnp.allclose(jnp.sum(out, axis=1), 1.0, atol=1e-4))
    # Only the per-step h @ W_hh matmul uses bf16 operands (f32 accumulation); the
    # resulting error at the softmax output is well below 1e-2.
    assert bool(jnp.allclose(out, ref, atol=1e-2, rtol=1e-2)), "mismatch vs reference"
    print("KERNEL_OK")
</pallas_src>

<mosaic_0001>
module attributes {stable_mosaic.version = 11 : i64} {
  func.func @_t2v_lstm_kernel(%arg0: memref<64x1xf32, #tpu.memory_space<vmem>>, %arg1: memref<8x128xf32, #tpu.memory_space<vmem>>, %arg2: memref<96x128xf32, #tpu.memory_space<vmem>>, %arg3: memref<8x3xf32, #tpu.memory_space<vmem>>) attributes {dimension_semantics = [], scalar_prefetch = 0 : i64, scratch_operands = 0 : i64, tpu.core_type = #tpu.core_type<tc>} {
    %c0 = arith.constant 0 : index
    %c0_0 = arith.constant 0 : index
    %0 = vector.load %arg1[%c0, %c0_0] : memref<8x128xf32, #tpu.memory_space<vmem>>, vector<1x32xf32>
    %c1 = arith.constant 1 : index
    %c0_1 = arith.constant 0 : index
    %1 = vector.load %arg1[%c1, %c0_1] : memref<8x128xf32, #tpu.memory_space<vmem>>, vector<1x32xf32>
    %c2 = arith.constant 2 : index
    %c0_2 = arith.constant 0 : index
    %2 = vector.load %arg1[%c2, %c0_2] : memref<8x128xf32, #tpu.memory_space<vmem>>, vector<1x128xf32>
    %c3 = arith.constant 3 : index
    %c0_3 = arith.constant 0 : index
    %3 = vector.load %arg1[%c3, %c0_3] : memref<8x128xf32, #tpu.memory_space<vmem>>, vector<1x3xf32>
    %c0_4 = arith.constant 0 : index
    %c0_5 = arith.constant 0 : index
    %4 = vector.load %arg2[%c0_4, %c0_5] : memref<96x128xf32, #tpu.memory_space<vmem>>, vector<32x128xf32>
    %c32 = arith.constant 32 : index
    %c0_6 = arith.constant 0 : index
    %5 = vector.load %arg2[%c32, %c0_6] : memref<96x128xf32, #tpu.memory_space<vmem>>, vector<32x128xf32>
    %6 = arith.truncf %5 : vector<32x128xf32> to vector<32x128xbf16>
    %c64 = arith.constant 64 : index
    %c0_7 = arith.constant 0 : index
    %7 = vector.load %arg2[%c64, %c0_7] : memref<96x128xf32, #tpu.memory_space<vmem>>, vector<32x128xf32>
    %c0_8 = arith.constant 0 : index
    %c0_9 = arith.constant 0 : index
    %8 = vector.load %arg0[%c0_8, %c0_9] : memref<64x1xf32, #tpu.memory_space<vmem>>, vector<64x1xf32>
    %9 = vector.broadcast %8 : vector<64x1xf32> to vector<64x32xf32>
    %10 = vector.broadcast %0 : vector<1x32xf32> to vector<64x32xf32>
    %11 = arith.mulf %9, %10 : vector<64x32xf32>
    %12 = vector.broadcast %1 : vector<1x32xf32> to vector<64x32xf32>
    %13 = arith.addf %11, %12 : vector<64x32xf32>
    %14 = tpu.iota {dimensions = array<i32: 1>} : vector<64x32xi32>
    %c31_i32 = arith.constant 31 : i32
    %15 = vector.broadcast %c31_i32 : i32 to vector<64x32xi32>
    %16 = arith.cmpi slt, %14, %15 : vector<64x32xi32>
    %17 = math.sin %13 : vector<64x32xf32>
    %18 = arith.select %16, %17, %13 : vector<64x32xi1>, vector<64x32xf32>
    %cst = arith.constant dense<0.000000e+00> : vector<64x128xf32>
    %19 = tpu.matmul %18, %4, %cst {dimension_numbers = #tpu.dot_dimension_numbers<[1], [0], [0], [1], [0, 0, 1, 1], [], []>} : vector<64x32xf32>, vector<32x128xf32>, vector<64x128xf32> -> vector<64x128xf32>
    %20 = vector.broadcast %2 : vector<1x128xf32> to vector<64x128xf32>
    %21 = arith.addf %19, %20 : vector<64x128xf32>
    %22 = tpu.iota {dimensions = array<i32: 1>} : vector<1x128xi32>
    %c64_i32 = arith.constant 64 : i32
    %23 = vector.broadcast %c64_i32 : i32 to vector<1x128xi32>
    %24 = arith.cmpi sge, %22, %23 : vector<1x128xi32>
    %c96_i32 = arith.constant 96 : i32
    %25 = vector.broadcast %c96_i32 : i32 to vector<1x128xi32>
    %26 = arith.cmpi slt, %22, %25 : vector<1x128xi32>
    %27 = arith.andi %24, %26 : vector<1x128xi1>
    %cst_10 = arith.constant 1.000000e+00 : f32
    %cst_11 = arith.constant 5.000000e-01 : f32
    %28 = vector.broadcast %cst_10 : f32 to vector<1x128xf32>
    %29 = vector.broadcast %cst_11 : f32 to vector<1x128xf32>
    %30 = arith.select %27, %28, %29 : vector<1x128xi1>, vector<1x128xf32>
    %cst_12 = arith.constant 0.000000e+00 : f32
    %cst_13 = arith.constant 5.000000e-01 : f32
    %31 = vector.broadcast %cst_12 : f32 to vector<1x128xf32>
    %32 = vector.broadcast %cst_13 : f32 to vector<1x128xf32>
    %33 = arith.select %27, %31, %32 : vector<1x128xi1>, vector<1x128xf32>
    %cst_14 = arith.constant 0.000000e+00 : f32
    %34 = vector.broadcast %cst_14 : f32 to vector<8x32xf32>
    %cst_15 = arith.constant 0.000000e+00 : f32
    %35 = vector.broadcast %cst_15 : f32 to vector<8x32xf32>
    %36 = vector.extract_strided_slice %21 {offsets = [0, 0], sizes = [8, 128], strides = [1, 1]} : vector<64x128xf32> to vector<8x128xf32>
    %37 = arith.truncf %34 : vector<8x32xf32> to vector<8x32xbf16>
    %cst_16 = arith.constant dense<0.000000e+00> : vector<8x128xf32>
    %38 = tpu.matmul %37, %6, %cst_16 {dimension_numbers = #tpu.dot_dimension_numbers<[1], [0], [0], [1], [0, 0, 1, 1], [], []>} : vector<8x32xbf16>, vector<32x128xbf16>, vector<8x128xf32> -> vector<8x128xf32>
    %39 = arith.addf %36, %38 : vector<8x128xf32>
    %40 = math.tanh %39 : vector<8x128xf32>
    %41 = vector.broadcast %30 : vector<1x128xf32> to vector<8x128xf32>
    %42 = arith.mulf %40, %41 : vector<8x128xf32>
    %43 = vector.broadcast %33 : vector<1x128xf32> to vector<8x128xf32>
    %44 = arith.addf %42, %43 : vector<8x128xf32>
    %45 = vector.extract_strided_slice %44 {offsets = [0, 0], sizes = [8, 32], strides = [1, 1]} : vector<8x128xf32> to vector<8x32xf32>
    %46 = vector.extract_strided_slice %44 {offsets = [0, 32], sizes = [8, 32], strides = [1, 1]} : vector<8x128xf32> to vector<8x32xf32>
    %47 = vector.extract_strided_slice %44 {offsets = [0, 64], sizes = [8, 32], strides = [1, 1]} : vector<8x128xf32> to vector<8x32xf32>
    %48 = vector.extract_strided_slice %44 {offsets = [0, 96], sizes = [8, 32], strides = [1, 1]} : vector<8x128xf32> to vector<8x32xf32>
    %49 = arith.mulf %46, %35 : vector<8x32xf32>
    %50 = arith.mulf %45, %47 : vector<8x32xf32>
    %51 = arith.addf %49, %50 : vector<8x32xf32>
    %52 = math.tanh %51 : vector<8x32xf32>
    %53 = arith.mulf %48, %52 : vector<8x32xf32>
    %54 = vector.extract_strided_slice %21 {offsets = [8, 0], sizes = [8, 128], strides = [1, 1]} : vector<64x128xf32> to vector<8x128xf32>
    %55 = arith.truncf %53 : vector<8x32xf32> to vector<8x32xbf16>
    %cst_17 = arith.constant dense<0.000000e+00> : vector<8x128xf32>
    %56 = tpu.matmul %55, %6, %cst_17 {dimension_numbers = #tpu.dot_dimension_numbers<[1], [0], [0], [1], [0, 0, 1, 1], [], []>} : vector<8x32xbf16>, vector<32x128xbf16>, vector<8x128xf32> -> vector<8x128xf32>
    %57 = arith.addf %54, %56 : vector<8x128xf32>
    %58 = math.tanh %57 : vector<8x128xf32>
    %59 = vector.broadcast %30 : vector<1x128xf32> to vector<8x128xf32>
    %60 = arith.mulf %58, %59 : vector<8x128xf32>
    %61 = vector.broadcast %33 : vector<1x128xf32> to vector<8x128xf32>
    %62 = arith.addf %60, %61 : vector<8x128xf32>
    %63 = vector.extract_strided_slice %62 {offsets = [0, 0], sizes = [8, 32], strides = [1, 1]} : vector<8x128xf32> to vector<8x32xf32>
    %64 = vector.extract_strided_slice %62 {offsets = [0, 32], sizes = [8, 32], strides = [1, 1]} : vector<8x128xf32> to vector<8x32xf32>
    %65 = vector.extract_strided_slice %62 {offsets = [0, 64], sizes = [8, 32], strides = [1, 1]} : vector<8x128xf32> to vector<8x32xf32>
    %66 = vector.extract_strided_slice %62 {offsets = [0, 96], sizes = [8, 32], strides = [1, 1]} : vector<8x128xf32> to vector<8x32xf32>
    %67 = arith.mulf %64, %51 : vector<8x32xf32>
    %68 = arith.mulf %63, %65 : vector<8x32xf32>
    %69 = arith.addf %67, %68 : vector<8x32xf32>
    %70 = math.tanh %69 : vector<8x32xf32>
    %71 = arith.mulf %66, %70 : vector<8x32xf32>
    %72 = vector.extract_strided_slice %21 {offsets = [16, 0], sizes = [8, 128], strides = [1, 1]} : vector<64x128xf32> to vector<8x128xf32>
    %73 = arith.truncf %71 : vector<8x32xf32> to vector<8x32xbf16>
    %cst_18 = arith.constant dense<0.000000e+00> : vector<8x128xf32>
    %74 = tpu.matmul %73, %6, %cst_18 {dimension_numbers = #tpu.dot_dimension_numbers<[1], [0], [0], [1], [0, 0, 1, 1], [], []>} : vector<8x32xbf16>, vector<32x128xbf16>, vector<8x128xf32> -> vector<8x128xf32>
    %75 = arith.addf %72, %74 : vector<8x128xf32>
    %76 = math.tanh %75 : vector<8x128xf32>
    %77 = vector.broadcast %30 : vector<1x128xf32> to vector<8x128xf32>
    %78 = arith.mulf %76, %77 : vector<8x128xf32>
    %79 = vector.broadcast %33 : vector<1x128xf32> to vector<8x128xf32>
    %80 = arith.addf %78, %79 : vector<8x128xf32>
    %81 = vector.extract_strided_slice %80 {offsets = [0, 0], sizes = [8, 32], strides = [1, 1]} : vector<8x128xf32> to vector<8x32xf32>
    %82 = vector.extract_strided_slice %80 {offsets = [0, 32], sizes = [8, 32], strides = [1, 1]} : vector<8x128xf32> to vector<8x32xf32>
    %83 = vector.extract_strided_slice %80 {offsets = [0, 64], sizes = [8, 32], strides = [1, 1]} : vector<8x128xf32> to vector<8x32xf32>
    %84 = vector.extract_strided_slice %80 {offsets = [0, 96], sizes = [8, 32], strides = [1, 1]} : vector<8x128xf32> to vector<8x32xf32>
    %85 = arith.mulf %82, %69 : vector<8x32xf32>
    %86 = arith.mulf %81, %83 : vector<8x32xf32>
    %87 = arith.addf %85, %86 : vector<8x32xf32>
    %88 = math.tanh %87 : vector<8x32xf32>
    %89 = arith.mulf %84, %88 : vector<8x32xf32>
    %90 = vector.extract_strided_slice %21 {offsets = [24, 0], sizes = [8, 128], strides = [1, 1]} : vector<64x128xf32> to vector<8x128xf32>
    %91 = arith.truncf %89 : vector<8x32xf32> to vector<8x32xbf16>
    %cst_19 = arith.constant dense<0.000000e+00> : vector<8x128xf32>
    %92 = tpu.matmul %91, %6, %cst_19 {dimension_numbers = #tpu.dot_dimension_numbers<[1], [0], [0], [1], [0, 0, 1, 1], [], []>} : vector<8x32xbf16>, vector<32x128xbf16>, vector<8x128xf32> -> vector<8x128xf32>
    %93 = arith.addf %90, %92 : vector<8x128xf32>
    %94 = math.tanh %93 : vector<8x128xf32>
    %95 = vector.broadcast %30 : vector<1x128xf32> to vector<8x128xf32>
    %96 = arith.mulf %94, %95 : vector<8x128xf32>
    %97 = vector.broadcast %33 : vector<1x128xf32> to vector<8x128xf32>
    %98 = arith.addf %96, %97 : vector<8x128xf32>
    %99 = vector.extract_strided_slice %98 {offsets = [0, 0], sizes = [8, 32], strides = [1, 1]} : vector<8x128xf32> to vector<8x32xf32>
    %100 = vector.extract_strided_slice %98 {offsets = [0, 32], sizes = [8, 32], strides = [1, 1]} : vector<8x128xf32> to vector<8x32xf32>
    %101 = vector.extract_strided_slice %98 {offsets = [0, 64], sizes = [8, 32], strides = [1, 1]} : vector<8x128xf32> to vector<8x32xf32>
    %102 = vector.extract_strided_slice %98 {offsets = [0, 96], sizes = [8, 32], strides = [1, 1]} : vector<8x128xf32> to vector<8x32xf32>
    %103 = arith.mulf %100, %87 : vector<8x32xf32>
    %104 = arith.mulf %99, %101 : vector<8x32xf32>
    %105 = arith.addf %103, %104 : vector<8x32xf32>
    %106 = math.tanh %105 : vector<8x32xf32>
    %107 = arith.mulf %102, %106 : vector<8x32xf32>
    %108 = vector.extract_strided_slice %21 {offsets = [32, 0], sizes = [8, 128], strides = [1, 1]} : vector<64x128xf32> to vector<8x128xf32>
    %109 = arith.truncf %107 : vector<8x32xf32> to vector<8x32xbf16>
    %cst_20 = arith.constant dense<0.000000e+00> : vector<8x128xf32>
    %110 = tpu.matmul %109, %6, %cst_20 {dimension_numbers = #tpu.dot_dimension_numbers<[1], [0], [0], [1], [0, 0, 1, 1], [], []>} : vector<8x32xbf16>, vector<32x128xbf16>, vector<8x128xf32> -> vector<8x128xf32>
    %111 = arith.addf %108, %110 : vector<8x128xf32>
    %112 = math.tanh %111 : vector<8x128xf32>
    %113 = vector.broadcast %30 : vector<1x128xf32> to vector<8x128xf32>
    %114 = arith.mulf %112, %113 : vector<8x128xf32>
    %115 = vector.broadcast %33 : vector<1x128xf32> to vector<8x128xf32>
    %116 = arith.addf %114, %115 : vector<8x128xf32>
    %117 = vector.extract_strided_slice %116 {offsets = [0, 0], sizes = [8, 32], strides = [1, 1]} : vector<8x128xf32> to vector<8x32xf32>
    %118 = vector.extract_strided_slice %116 {offsets = [0, 32], sizes = [8, 32], strides = [1, 1]} : vector<8x128xf32> to vector<8x32xf32>
    %119 = vector.extract_strided_slice %116 {offsets = [0, 64], sizes = [8, 32], strides = [1, 1]} : vector<8x128xf32> to vector<8x32xf32>
    %120 = vector.extract_strided_slice %116 {offsets = [0, 96], sizes = [8, 32], strides = [1, 1]} : vector<8x128xf32> to vector<8x32xf32>
    %121 = arith.mulf %118, %105 : vector<8x32xf32>
    %122 = arith.mulf %117, %119 : vector<8x32xf32>
    %123 = arith.addf %121, %122 : vector<8x32xf32>
    %124 = math.tanh %123 : vector<8x32xf32>
    %125 = arith.mulf %120, %124 : vector<8x32xf32>
    %126 = vector.extract_strided_slice %21 {offsets = [40, 0], sizes = [8, 128], strides = [1, 1]} : vector<64x128xf32> to vector<8x128xf32>
    %127 = arith.truncf %125 : vector<8x32xf32> to vector<8x32xbf16>
    %cst_21 = arith.constant dense<0.000000e+00> : vector<8x128xf32>
    %128 = tpu.matmul %127, %6, %cst_21 {dimension_numbers = #tpu.dot_dimension_numbers<[1], [0], [0], [1], [0, 0, 1, 1], [], []>} : vector<8x32xbf16>, vector<32x128xbf16>, vector<8x128xf32> -> vector<8x128xf32>
    %129 = arith.addf %126, %128 : vector<8x128xf32>
    %130 = math.tanh %129 : vector<8x128xf32>
    %131 = vector.broadcast %30 : vector<1x128xf32> to vector<8x128xf32>
    %132 = arith.mulf %130, %131 : vector<8x128xf32>
    %133 = vector.broadcast %33 : vector<1x128xf32> to vector<8x128xf32>
    %134 = arith.addf %132, %133 : vector<8x128xf32>
    %135 = vector.extract_strided_slice %134 {offsets = [0, 0], sizes = [8, 32], strides = [1, 1]} : vector<8x128xf32> to vector<8x32xf32>
    %136 = vector.extract_strided_slice %134 {offsets = [0, 32], sizes = [8, 32], strides = [1, 1]} : vector<8x128xf32> to vector<8x32xf32>
    %137 = vector.extract_strided_slice %134 {offsets = [0, 64], sizes = [8, 32], strides = [1, 1]} : vector<8x128xf32> to vector<8x32xf32>
    %138 = vector.extract_strided_slice %134 {offsets = [0, 96], sizes = [8, 32], strides = [1, 1]} : vector<8x128xf32> to vector<8x32xf32>
    %139 = arith.mulf %136, %123 : vector<8x32xf32>
    %140 = arith.mulf %135, %137 : vector<8x32xf32>
    %141 = arith.addf %139, %140 : vector<8x32xf32>
    %142 = math.tanh %141 : vector<8x32xf32>
    %143 = arith.mulf %138, %142 : vector<8x32xf32>
    %144 = vector.extract_strided_slice %21 {offsets = [48, 0], sizes = [8, 128], strides = [1, 1]} : vector<64x128xf32> to vector<8x128xf32>
    %145 = arith.truncf %143 : vector<8x32xf32> to vector<8x32xbf16>
    %cst_22 = arith.constant dense<0.000000e+00> : vector<8x128xf32>
    %146 = tpu.matmul %145, %6, %cst_22 {dimension_numbers = #tpu.dot_dimension_numbers<[1], [0], [0], [1], [0, 0, 1, 1], [], []>} : vector<8x32xbf16>, vector<32x128xbf16>, vector<8x128xf32> -> vector<8x128xf32>
    %147 = arith.addf %144, %146 : vector<8x128xf32>
    %148 = math.tanh %147 : vector<8x128xf32>
    %149 = vector.broadcast %30 : vector<1x128xf32> to vector<8x128xf32>
    %150 = arith.mulf %148, %149 : vector<8x128xf32>
    %151 = vector.broadcast %33 : vector<1x128xf32> to vector<8x128xf32>
    %152 = arith.addf %150, %151 : vector<8x128xf32>
    %153 = vector.extract_strided_slice %152 {offsets = [0, 0], sizes = [8, 32], strides = [1, 1]} : vector<8x128xf32> to vector<8x32xf32>
    %154 = vector.extract_strided_slice %152 {offsets = [0, 32], sizes = [8, 32], strides = [1, 1]} : vector<8x128xf32> to vector<8x32xf32>
    %155 = vector.extract_strided_slice %152 {offsets = [0, 64], sizes = [8, 32], strides = [1, 1]} : vector<8x128xf32> to vector<8x32xf32>
    %156 = vector.extract_strided_slice %152 {offsets = [0, 96], sizes = [8, 32], strides = [1, 1]} : vector<8x128xf32> to vector<8x32xf32>
    %157 = arith.mulf %154, %141 : vector<8x32xf32>
    %158 = arith.mulf %153, %155 : vector<8x32xf32>
    %159 = arith.addf %157, %158 : vector<8x32xf32>
    %160 = math.tanh %159 : vector<8x32xf32>
    %161 = arith.mulf %156, %160 : vector<8x32xf32>
    %162 = vector.extract_strided_slice %21 {offsets = [56, 0], sizes = [8, 128], strides = [1, 1]} : vector<64x128xf32> to vector<8x128xf32>
    %163 = arith.truncf %161 : vector<8x32xf32> to vector<8x32xbf16>
    %cst_23 = arith.constant dense<0.000000e+00> : vector<8x128xf32>
    %164 = tpu.matmul %163, %6, %cst_23 {dimension_numbers = #tpu.dot_dimension_numbers<[1], [0], [0], [1], [0, 0, 1, 1], [], []>} : vector<8x32xbf16>, vector<32x128xbf16>, vector<8x128xf32> -> vector<8x128xf32>
    %165 = arith.addf %162, %164 : vector<8x128xf32>
    %166 = math.tanh %165 : vector<8x128xf32>
    %167 = vector.broadcast %30 : vector<1x128xf32> to vector<8x128xf32>
    %168 = arith.mulf %166, %167 : vector<8x128xf32>
    %169 = vector.broadcast %33 : vector<1x128xf32> to vector<8x128xf32>
    %170 = arith.addf %168, %169 : vector<8x128xf32>
    %171 = vector.extract_strided_slice %170 {offsets = [0, 0], sizes = [8, 32], strides = [1, 1]} : vector<8x128xf32> to vector<8x32xf32>
    %172 = vector.extract_strided_slice %170 {offsets = [0, 32], sizes = [8, 32], strides = [1, 1]} : vector<8x128xf32> to vector<8x32xf32>
    %173 = vector.extract_strided_slice %170 {offsets = [0, 64], sizes = [8, 32], strides = [1, 1]} : vector<8x128xf32> to vector<8x32xf32>
    %174 = vector.extract_strided_slice %170 {offsets = [0, 96], sizes = [8, 32], strides = [1, 1]} : vector<8x128xf32> to vector<8x32xf32>
    %175 = arith.mulf %172, %159 : vector<8x32xf32>
    %176 = arith.mulf %171, %173 : vector<8x32xf32>
    %177 = arith.addf %175, %176 : vector<8x32xf32>
    %178 = math.tanh %177 : vector<8x32xf32>
    %179 = arith.mulf %174, %178 : vector<8x32xf32>
    %cst_24 = arith.constant dense<0.000000e+00> : vector<8x128xf32>
    %180 = tpu.matmul %179, %7, %cst_24 {dimension_numbers = #tpu.dot_dimension_numbers<[1], [0], [0], [1], [0, 0, 1, 1], [], []>} : vector<8x32xf32>, vector<32x128xf32>, vector<8x128xf32> -> vector<8x128xf32>
    %181 = vector.extract_strided_slice %180 {offsets = [0, 0], sizes = [8, 3], strides = [1, 1]} : vector<8x128xf32> to vector<8x3xf32>
    %182 = vector.broadcast %3 : vector<1x3xf32> to vector<8x3xf32>
    %183 = arith.addf %181, %182 : vector<8x3xf32>
    %cst_25 = arith.constant dense<0xFF800000> : vector<8xf32>
    %184 = vector.multi_reduction <maximumf>, %183, %cst_25 [1] : vector<8x3xf32> to vector<8xf32>
    %185 = vector.shape_cast %184 : vector<8xf32> to vector<8x1xf32>
    %186 = vector.broadcast %185 : vector<8x1xf32> to vector<8x3xf32>
    %187 = arith.subf %183, %186 : vector<8x3xf32>
    %188 = math.exp %187 : vector<8x3xf32>
    %cst_26 = arith.constant dense<0.000000e+00> : vector<8xf32>
    %189 = vector.multi_reduction <add>, %188, %cst_26 [1] : vector<8x3xf32> to vector<8xf32>
    %190 = vector.shape_cast %189 : vector<8xf32> to vector<8x1xf32>
    %191 = vector.broadcast %190 : vector<8x1xf32> to vector<8x3xf32>
    %192 = arith.divf %188, %191 : vector<8x3xf32>
    %c0_27 = arith.constant 0 : index
    %c0_28 = arith.constant 0 : index
    %193 = vector.load %arg3[%c0_27, %c0_28] : memref<8x3xf32, #tpu.memory_space<vmem>>, vector<8x3xf32>
    tpu.vector_store %arg3[%c0_27, %c0_28], %192 {strides = array<i32>} : memref<8x3xf32, #tpu.memory_space<vmem>>, vector<8x3xf32>,
    return
  }
}

</mosaic_0001>

<llo_original>
// kernel: t2v_lstm_forward.1
$region0: #{t2v_lstm_forward.1}
  #allocation0 [shape = 'u32[]', space=smem, size = 0x4, offset = 0x4, fixed_abs, tag = 'smem constant byte address 0x4 - core index']
  #allocation1 [shape = 'u32[72,128]{1,0:T(1,128)}', space=vmem, size = 0x9000, scoped, tag = 'internal scratch']
  %s0 = inlined_call_operand.vmem [shape: f32[64,1], index: 0, kind: input, shape index: {}]
  %s1 = inlined_call_operand.vmem [shape: f32[8,128], index: 1, kind: input, shape index: {}]
  %s2 = inlined_call_operand.vmem [shape: f32[96,128], index: 2, kind: input, shape index: {}]
  %s3 = inlined_call_operand.vmem [shape: f32[8,3], index: 3, kind: output, shape index: {}]
  %s4 = sld [smem:[#allocation0]]
  $region22: #{t2v_lstm_forward.1} parent=0
    _
  %s6 = ssub.s32 1, %s4
  %s7 = scalar_select 0, %s6, %s4
  // Predicated region
  $region2: #{t2v_lstm_forward.1} parent=0 // pred_check
    _
  $region3: #{t2v_lstm_forward.1} parent=0 // pred_check_branch
    %9 = sbr.rel (0) target = $region5
  $region4: #{t2v_lstm_forward.1} parent=0 // pred_region
    _
  $region5: #{t2v_lstm_forward.1} parent=0 // pred_fallthru
    _
  // Predicated region
  $region6: #{t2v_lstm_forward.1} parent=0 // pred_check
    _
  $region7: #{t2v_lstm_forward.1} parent=0 // pred_check_branch
    %11 = sbr.rel (0) target = $region9
  $region8: #{t2v_lstm_forward.1} parent=0 // pred_region
    _
  $region9: #{t2v_lstm_forward.1} parent=0 // pred_fallthru
    _
  // Predicated region
  $region10: #{t2v_lstm_forward.1} parent=0 // pred_check
    _
  $region11: #{t2v_lstm_forward.1} parent=0 // pred_check_branch
    %13 = sbr.rel (0) target = $region13
  $region12: #{t2v_lstm_forward.1} parent=0 // pred_region
    _
  $region13: #{t2v_lstm_forward.1} parent=0 // pred_fallthru
    _
  %v15 = vld [vmem:[%s1] sm:$0x1]
  %v16 = vld [vmem:[%s1 + $0x1] sm:$0x1]
  %v17 = vld [vmem:[%s1 + $0x2] sm:$0x1]
  %v18 = vld [vmem:[%s1 + $0x3] sm:$0x1]
  %v19 = vld [vmem:[%s2] sm:$0xff]
  %v20 = vld [vmem:[%s2 + $0x8] sm:$0xff]
  %v21 = vld [vmem:[%s2 + $0x10] sm:$0xff]
  %v22 = vld [vmem:[%s2 + $0x18] sm:$0xff]
  %v23 = vld [vmem:[%s2 + $0x20] sm:$0xff]
  %v24 = vld [vmem:[%s2 + $0x28] sm:$0xff]
  %v25 = vld [vmem:[%s2 + $0x30] sm:$0xff]
  %v26 = vld [vmem:[%s2 + $0x38] sm:$0xff]
  %v27 = vpack.c.bf16 %v24, %v23
  %v28 = vpack.c.bf16 %v26, %v25
  %v29 = vld [vmem:[%s2 + $0x40] sm:$0xff]
  %v30 = vld [vmem:[%s2 + $0x48] sm:$0xff]
  %v31 = vld [vmem:[%s2 + $0x50] sm:$0xff]
  %v32 = vld [vmem:[%s2 + $0x58] sm:$0xff]
  %v33 = vld [vmem:[%s0] sm:$0xff]
  %v34 = vld [vmem:[%s0 + $0x8] sm:$0xff]
  %v35 = vld [vmem:[%s0 + $0x10] sm:$0xff]
  %v36 = vld [vmem:[%s0 + $0x18] sm:$0xff]
  %v37 = vld [vmem:[%s0 + $0x20] sm:$0xff]
  %v38 = vld [vmem:[%s0 + $0x28] sm:$0xff]
  %v39 = vld [vmem:[%s0 + $0x30] sm:$0xff]
  %v40 = vld [vmem:[%s0 + $0x38] sm:$0xff]
  %42 = vset.pattern.permute.xlu0 0
  %43 = vperm.xlu0 %42, %v33
  %v44 = vpop.permute.xlu0 %43
  %47 = vset.pattern.permute.xlu0 0
  %48 = vperm.xlu0 %47, %v34
  %v49 = vpop.permute.xlu0 %48
  %52 = vset.pattern.permute.xlu0 0
  %53 = vperm.xlu0 %52, %v35
  %v54 = vpop.permute.xlu0 %53
  %57 = vset.pattern.permute.xlu0 0
  %58 = vperm.xlu0 %57, %v36
  %v59 = vpop.permute.xlu0 %58
  %62 = vset.pattern.permute.xlu0 0
  %63 = vperm.xlu0 %62, %v37
  %v64 = vpop.permute.xlu0 %63
  %67 = vset.pattern.permute.xlu0 0
  %68 = vperm.xlu0 %67, %v38
  %v69 = vpop.permute.xlu0 %68
  %72 = vset.pattern.permute.xlu0 0
  %73 = vperm.xlu0 %72, %v39
  %v74 = vpop.permute.xlu0 %73
  %77 = vset.pattern.permute.xlu0 0
  %78 = vperm.xlu0 %77, %v40
  %v79 = vpop.permute.xlu0 %78
  %v81 = vperm.slane %v15, 0
  %v82 = vmul.f32 %v44, %v81
  %v83 = vmul.f32 %v49, %v81
  %v84 = vmul.f32 %v54, %v81
  %v85 = vmul.f32 %v59, %v81
  %v86 = vmul.f32 %v64, %v81
  %v87 = vmul.f32 %v69, %v81
  %v88 = vmul.f32 %v74, %v81
  %v89 = vmul.f32 %v79, %v81
  %v90 = vperm.slane %v16, 0
  %v91 = vadd.f32 %v82, %v90
  %v92 = vadd.f32 %v83, %v90
  %v93 = vadd.f32 %v84, %v90
  %v94 = vadd.f32 %v85, %v90
  %v95 = vadd.f32 %v86, %v90
  %v96 = vadd.f32 %v87, %v90
  %v97 = vadd.f32 %v88, %v90
  %v98 = vadd.f32 %v89, %v90
  %v99 = vlaneseq
  %v100 = vand.u32 %v99, 127
  %vm101 = vcmp.lt.s32.totalorder %v100, 31
  %v102 = vand.u32 2147483647, %v91
  %vm103 = vcmp.le.f32.partialorder %v102, 0.7853982
  %vm104 = vcmp.lt.s32.totalorder %v91, 0
  %v105 = vand.u32 %v91, 2139095040
  %v106 = vshrl.u32 %v105, 23
  %v107 = vsub.s32 %v106, 127
  %v108 = vand.u32 2147483647, %v91
  %v109 = vand.u32 %v108, 8388607
  %v110 = vor.u32 %v109, 8388608
  %v111 = vsub.s32 0, %v110
  %v112 = vadd.s32 %v107, 1
  %vm113 = vcmp.gt.s32.totalorder %v112, 0
  %v114 = vsel %vm113, %v112, 0
  %v115 = vshrl.u32 %v114, 5
  %v116 = vand.u32 %v114, 31
  %v117 = vsub.s32 32, %v116
  %v118 = vshrl.u32 683565275, %v117
  %v119 = vshll.u32 683565275, %v116
  %v120 = vshrl.u32 2475754826, %v117
  %v121 = vor.u32 %v119, %v120
  %v122 = vshll.u32 2475754826, %v116
  %v123 = vshrl.u32 2131351028, %v117
  %v124 = vor.u32 %v122, %v123
  %v125 = vshll.u32 2131351028, %v116
  %v126 = vshrl.u32 2102212464, %v117
  %v127 = vor.u32 %v125, %v126
  %v128 = vshll.u32 2102212464, %v116
  %v129 = vshrl.u32 920167782, %v117
  %v130 = vor.u32 %v128, %v129
  %v131 = vshll.u32 920167782, %v116
  %v132 = vshrl.u32 1326507024, %v117
  %v133 = vor.u32 %v131, %v132
  %vm134 = vcmp.lt.s32.totalorder %v115, 1
  %vm135 = vcmp.lt.s32.totalorder %v115, 2
  %vm136 = vcmp.lt.s32.totalorder %v115, 3
  %vm137 = vcmp.lt.s32.totalorder %v115, 4
  %v138 = vsel %vm134, %v118, %v121
  %v139 = vsel %vm137, %v127, 2102212464
  %v140 = vsel %vm136, %v124, %v139
  %v141 = vsel %vm135, %v138, %v140
  %v142 = vsel %vm134, %v121, %v124
  %v143 = vsel %vm137, %v130, 920167782
  %v144 = vsel %vm136, %v127, %v143
  %v145 = vsel %vm135, %v142, %v144
  %v146 = vsel %vm134, %v124, %v127
  %v147 = vsel %vm137, %v133, 1326507024
  %v148 = vsel %vm136, %v130, %v147
  %v149 = vsel %vm135, %v146, %v148
  %v150 = vshll.u32 %v110, 8
  %v151 = vand.u32 %v150, 65535
  %v152 = vshrl.u32 %v150, 16
  %v153 = vand.u32 %v149, 65535
  %v154 = vshrl.u32 %v149, 16
  %v155 = vmul.u32 %v151, %v153
  %v156 = vmul.u32 %v151, %v154
  %v157 = vmul.u32 %v152, %v153
  %v158 = vmul.u32 %v152, %v154
  %v159 = vshll.u32 %v156, 16
  %v160 = vshrl.u32 %v156, 16
  %v161 = vshll.u32 %v157, 16
  %v162 = vshrl.u32 %v157, 16
  %vm163 = vc.u32 %v155, %v159
  %v164 = vsel %vm163, 1, 0
  %v165 = vadd.s32 %v155, %v159
  %v166 = vadd.s32 %v158, %v164
  %vm167 = vc.u32 %v165, %v161
  %v168 = vsel %vm167, 1, 0
  %v169 = vadd.s32 %v165, %v161
  %v170 = vadd.s32 %v166, %v168
  %v171 = vadd.s32 %v170, %v160
  %v172 = vadd.s32 %v171, %v162
  %v173 = vand.u32 %v150, 65535
  %v174 = vshrl.u32 %v150, 16
  %v175 = vand.u32 %v145, 65535
  %v176 = vshrl.u32 %v145, 16
  %v177 = vmul.u32 %v173, %v175
  %v178 = vmul.u32 %v173, %v176
  %v179 = vmul.u32 %v174, %v175
  %v180 = vmul.u32 %v174, %v176
  %v181 = vshll.u32 %v178, 16
  %v182 = vshrl.u32 %v178, 16
  %v183 = vshll.u32 %v179, 16
  %v184 = vshrl.u32 %v179, 16
  %vm185 = vc.u32 %v177, %v181
  %v186 = vsel %vm185, 1, 0
  %v187 = vadd.s32 %v177, %v181
  %v188 = vadd.s32 %v180, %v186
  %vm189 = vc.u32 %v187, %v183
  %v190 = vsel %vm189, 1, 0
  %v191 = vadd.s32 %v187, %v183
  %v192 = vadd.s32 %v188, %v190
  %v193 = vadd.s32 %v192, %v182
  %v194 = vadd.s32 %v193, %v184
  %v195 = vmul.u32 %v150, %v141
  %v196 = vadd.s32 %v172, %v191
  %vm197 = vc.u32 %v172, %v191
  %v198 = vadd.s32 %v194, 1
  %v199 = vsel %vm197, %v198, %v194
  %v200 = vadd.s32 %v195, %v199
  %v201 = vadd.s32 %v200, 536870912
  %v202 = vshrl.u32 %v201, 30
  %v203 = vshll.u32 %v202, 30
  %v204 = vsub.s32 %v200, %v203
  %vm205 = vcmp.lt.s32.totalorder %v204, 0
  %v206 = vsub.s32 0, %v204
  %v207 = vsel %vm205, %v206, %v204
  %v208 = vclz %v207
  %v209 = vsub.s32 %v208, 2
  %vm210 = vcmp.gt.s32.totalorder 0, %v209
  %v211 = vsel %vm210, 0, %v209
  %v212 = vsub.s32 32, %v211
  %v213 = vshll.u32 %v204, %v211
  %v214 = vshrl.u32 %v196, %v212
  %v215 = vor.u32 %v213, %v214
  %v216 = vsub.s32 4294967266, %v211
  %v217 = vadd.s32 %v216, 127
  %v218 = vshll.u32 %v217, 23
  %v219 = vor.u32 4788187, %v218
  %v220 = vand.u32 2147483647, %v219
  %v222 = vcvt.s32.f32 %v215
  %v223 = vmul.f32 %v222, %v220
  %v224 = vxor.u32 %v223, 2147483648
  %v225 = vsel %vm104, %v224, %v223
  %v226 = vsub.s32 4, %v202
  %v227 = vsel %vm104, %v226, %v202
  %v228 = vsel %vm103, %v91, %v225
  %v229 = vsel %vm103, 0, %v227
  %v230 = vmul.f32 %v228, %v228
  %v231 = vmul.f32 %v230, -0.001358992
  %v232 = vadd.f32 %v231, 0.041655596
  %v233 = vmul.f32 %v230, %v232
  %v234 = vadd.f32 %v233, -0.4999988
  %v235 = vmul.f32 %v230, %v234
  %v236 = vadd.f32 1.0, %v235
  %v237 = vmul.f32 %v228, %v228
  %v238 = vmul.f32 %v237, -0.00019511016
  %v239 = vadd.f32 %v238, 0.008332121
  %v240 = vmul.f32 %v237, %v239
  %v241 = vadd.f32 %v240, -0.16666654
  %v242 = vmul.f32 %v237, %v241
  %v243 = vadd.f32 %v242, 1.0
  %v244 = vmul.f32 %v243, %v228
  %vm245 = vweird.f32 %v91
  %v246 = vadd.s32 %v229, 3
  %v247 = vand.u32 %v246, 3
  %vm248 = vcmp.lt.s32.totalorder %v247, 2
  %vm249 = vcmp.eq.s32.totalorder %v247, 0
  %v250 = vxor.u32 %v244, 2147483648
  %v251 = vsel %vm249, %v236, %v250
  %vm252 = vcmp.eq.s32.totalorder %v247, 2
  %v253 = vxor.u32 %v236, 2147483648
  %v254 = vsel %vm252, %v253, %v244
  %v255 = vsel %vm248, %v251, %v254
  %v256 = vsel %vm245, nan, %v255
  %v257 = vand.u32 2147483647, %v92
  %vm258 = vcmp.le.f32.partialorder %v257, 0.7853982
  %vm259 = vcmp.lt.s32.totalorder %v92, 0
  %v260 = vand.u32 %v92, 2139095040
  %v261 = vshrl.u32 %v260, 23
  %v262 = vsub.s32 %v261, 127
  %v263 = vand.u32 2147483647, %v92
  %v264 = vand.u32 %v263, 8388607
  %v265 = vor.u32 %v264, 8388608
  %v266 = vsub.s32 0, %v265
  %v267 = vadd.s32 %v262, 1
  %vm268 = vcmp.gt.s32.totalorder %v267, 0
  %v269 = vsel %vm268, %v267, 0
  %v270 = vshrl.u32 %v269, 5
  %v271 = vand.u32 %v269, 31
  %v272 = vsub.s32 32, %v271
  %v273 = vshrl.u32 683565275, %v272
  %v274 = vshll.u32 683565275, %v271
  %v275 = vshrl.u32 2475754826, %v272
  %v276 = vor.u32 %v274, %v275
  %v277 = vshll.u32 2475754826, %v271
  %v278 = vshrl.u32 2131351028, %v272
  %v279 = vor.u32 %v277, %v278
  %v280 = vshll.u32 2131351028, %v271
  %v281 = vshrl.u32 2102212464, %v272
  %v282 = vor.u32 %v280, %v281
  %v283 = vshll.u32 2102212464, %v271
  %v284 = vshrl.u32 920167782, %v272
  %v285 = vor.u32 %v283, %v284
  %v286 = vshll.u32 920167782, %v271
  %v287 = vshrl.u32 1326507024, %v272
  %v288 = vor.u32 %v286, %v287
  %vm289 = vcmp.lt.s32.totalorder %v270, 1
  %vm290 = vcmp.lt.s32.totalorder %v270, 2
  %vm291 = vcmp.lt.s32.totalorder %v270, 3
  %vm292 = vcmp.lt.s32.totalorder %v270, 4
  %v293 = vsel %vm289, %v273, %v276
  %v294 = vsel %vm292, %v282, 2102212464
  %v295 = vsel %vm291, %v279, %v294
  %v296 = vsel %vm290, %v293, %v295
  %v297 = vsel %vm289, %v276, %v279
  %v298 = vsel %vm292, %v285, 920167782
  %v299 = vsel %vm291, %v282, %v298
  %v300 = vsel %vm290, %v297, %v299
  %v301 = vsel %vm289, %v279, %v282
  %v302 = vsel %vm292, %v288, 1326507024
  %v303 = vsel %vm291, %v285, %v302
  %v304 = vsel %vm290, %v301, %v303
  %v305 = vshll.u32 %v265, 8
  %v306 = vand.u32 %v305, 65535
  %v307 = vshrl.u32 %v305, 16
  %v308 = vand.u32 %v304, 65535
  %v309 = vshrl.u32 %v304, 16
  %v310 = vmul.u32 %v306, %v308
  %v311 = vmul.u32 %v306, %v309
  %v312 = vmul.u32 %v307, %v308
  %v313 = vmul.u32 %v307, %v309
  %v314 = vshll.u32 %v311, 16
  %v315 = vshrl.u32 %v311, 16
  %v316 = vshll.u32 %v312, 16
  %v317 = vshrl.u32 %v312, 16
  %vm318 = vc.u32 %v310, %v314
  %v319 = vsel %vm318, 1, 0
  %v320 = vadd.s32 %v310, %v314
  %v321 = vadd.s32 %v313, %v319
  %vm322 = vc.u32 %v320, %v316
  %v323 = vsel %vm322, 1, 0
  %v324 = vadd.s32 %v320, %v316
  %v325 = vadd.s32 %v321, %v323
  %v326 = vadd.s32 %v325, %v315
  %v327 = vadd.s32 %v326, %v317
  %v328 = vand.u32 %v305, 65535
  %v329 = vshrl.u32 %v305, 16
  %v330 = vand.u32 %v300, 65535
  %v331 = vshrl.u32 %v300, 16
  %v332 = vmul.u32 %v328, %v330
  %v333 = vmul.u32 %v328, %v331
  %v334 = vmul.u32 %v329, %v330
  %v335 = vmul.u32 %v329, %v331
  %v336 = vshll.u32 %v333, 16
  %v337 = vshrl.u32 %v333, 16
  %v338 = vshll.u32 %v334, 16
  %v339 = vshrl.u32 %v334, 16
  %vm340 = vc.u32 %v332, %v336
  %v341 = vsel %vm340, 1, 0
  %v342 = vadd.s32 %v332, %v336
  %v343 = vadd.s32 %v335, %v341
  %vm344 = vc.u32 %v342, %v338
  %v345 = vsel %vm344, 1, 0
  %v346 = vadd.s32 %v342, %v338
  %v347 = vadd.s32 %v343, %v345
  %v348 = vadd.s32 %v347, %v337
  %v349 = vadd.s32 %v348, %v339
  %v350 = vmul.u32 %v305, %v296
  %v351 = vadd.s32 %v327, %v346
  %vm352 = vc.u32 %v327, %v346
  %v353 = vadd.s32 %v349, 1
  %v354 = vsel %vm352, %v353, %v349
  %v355 = vadd.s32 %v350, %v354
  %v356 = vadd.s32 %v355, 536870912
  %v357 = vshrl.u32 %v356, 30
  %v358 = vshll.u32 %v357, 30
  %v359 = vsub.s32 %v355, %v358
  %vm360 = vcmp.lt.s32.totalorder %v359, 0
  %v361 = vsub.s32 0, %v359
  %v362 = vsel %vm360, %v361, %v359
  %v363 = vclz %v362
  %v364 = vsub.s32 %v363, 2
  %vm365 = vcmp.gt.s32.totalorder 0, %v364
  %v366 = vsel %vm365, 0, %v364
  %v367 = vsub.s32 32, %v366
  %v368 = vshll.u32 %v359, %v366
  %v369 = vshrl.u32 %v351, %v367
  %v370 = vor.u32 %v368, %v369
  %v371 = vsub.s32 4294967266, %v366
  %v372 = vadd.s32 %v371, 127
  %v373 = vshll.u32 %v372, 23
  %v374 = vor.u32 4788187, %v373
  %v375 = vand.u32 2147483647, %v374
  %v377 = vcvt.s32.f32 %v370
  %v378 = vmul.f32 %v377, %v375
  %v379 = vxor.u32 %v378, 2147483648
  %v380 = vsel %vm259, %v379, %v378
  %v381 = vsub.s32 4, %v357
  %v382 = vsel %vm259, %v381, %v357
  %v383 = vsel %vm258, %v92, %v380
  %v384 = vsel %vm258, 0, %v382
  %v385 = vmul.f32 %v383, %v383
  %v386 = vmul.f32 %v385, -0.001358992
  %v387 = vadd.f32 %v386, 0.041655596
  %v388 = vmul.f32 %v385, %v387
  %v389 = vadd.f32 %v388, -0.4999988
  %v390 = vmul.f32 %v385, %v389
  %v391 = vadd.f32 1.0, %v390
  %v392 = vmul.f32 %v383, %v383
  %v393 = vmul.f32 %v392, -0.00019511016
  %v394 = vadd.f32 %v393, 0.008332121
  %v395 = vmul.f32 %v392, %v394
  %v396 = vadd.f32 %v395, -0.16666654
  %v397 = vmul.f32 %v392, %v396
  %v398 = vadd.f32 %v397, 1.0
  %v399 = vmul.f32 %v398, %v383
  %vm400 = vweird.f32 %v92
  %v401 = vadd.s32 %v384, 3
  %v402 = vand.u32 %v401, 3
  %vm403 = vcmp.lt.s32.totalorder %v402, 2
  %vm404 = vcmp.eq.s32.totalorder %v402, 0
  %v405 = vxor.u32 %v399, 2147483648
  %v406 = vsel %vm404, %v391, %v405
  %vm407 = vcmp.eq.s32.totalorder %v402, 2
  %v408 = vxor.u32 %v391, 2147483648
  %v409 = vsel %vm407, %v408, %v399
  %v410 = vsel %vm403, %v406, %v409
  %v411 = vsel %vm400, nan, %v410
  %v412 = vand.u32 2147483647, %v93
  %vm413 = vcmp.le.f32.partialorder %v412, 0.7853982
  %vm414 = vcmp.lt.s32.totalorder %v93, 0
  %v415 = vand.u32 %v93, 2139095040
  %v416 = vshrl.u32 %v415, 23
  %v417 = vsub.s32 %v416, 127
  %v418 = vand.u32 2147483647, %v93
  %v419 = vand.u32 %v418, 8388607
  %v420 = vor.u32 %v419, 8388608
  %v421 = vsub.s32 0, %v420
  %v422 = vadd.s32 %v417, 1
  %vm423 = vcmp.gt.s32.totalorder %v422, 0
  %v424 = vsel %vm423, %v422, 0
  %v425 = vshrl.u32 %v424, 5
  %v426 = vand.u32 %v424, 31
  %v427 = vsub.s32 32, %v426
  %v428 = vshrl.u32 683565275, %v427
  %v429 = vshll.u32 683565275, %v426
  %v430 = vshrl.u32 2475754826, %v427
  %v431 = vor.u32 %v429, %v430
  %v432 = vshll.u32 2475754826, %v426
  %v433 = vshrl.u32 2131351028, %v427
  %v434 = vor.u32 %v432, %v433
  %v435 = vshll.u32 2131351028, %v426
  %v436 = vshrl.u32 2102212464, %v427
  %v437 = vor.u32 %v435, %v436
  %v438 = vshll.u32 2102212464, %v426
  %v439 = vshrl.u32 920167782, %v427
  %v440 = vor.u32 %v438, %v439
  %v441 = vshll.u32 920167782, %v426
  %v442 = vshrl.u32 1326507024, %v427
  %v443 = vor.u32 %v441, %v442
  %vm444 = vcmp.lt.s32.totalorder %v425, 1
  %vm445 = vcmp.lt.s32.totalorder %v425, 2
  %vm446 = vcmp.lt.s32.totalorder %v425, 3
  %vm447 = vcmp.lt.s32.totalorder %v425, 4
  %v448 = vsel %vm444, %v428, %v431
  %v449 = vsel %vm447, %v437, 2102212464
  %v450 = vsel %vm446, %v434, %v449
  %v451 = vsel %vm445, %v448, %v450
  %v452 = vsel %vm444, %v431, %v434
  %v453 = vsel %vm447, %v440, 920167782
  %v454 = vsel %vm446, %v437, %v453
  %v455 = vsel %vm445, %v452, %v454
  %v456 = vsel %vm444, %v434, %v437
  %v457 = vsel %vm447, %v443, 1326507024
  %v458 = vsel %vm446, %v440, %v457
  %v459 = vsel %vm445, %v456, %v458
  %v460 = vshll.u32 %v420, 8
  %v461 = vand.u32 %v460, 65535
  %v462 = vshrl.u32 %v460, 16
  %v463 = vand.u32 %v459, 65535
  %v464 = vshrl.u32 %v459, 16
  %v465 = vmul.u32 %v461, %v463
  %v466 = vmul.u32 %v461, %v464
  %v467 = vmul.u32 %v462, %v463
  %v468 = vmul.u32 %v462, %v464
  %v469 = vshll.u32 %v466, 16
  %v470 = vshrl.u32 %v466, 16
  %v471 = vshll.u32 %v467, 16
  %v472 = vshrl.u32 %v467, 16
  %vm473 = vc.u32 %v465, %v469
  %v474 = vsel %vm473, 1, 0
  %v475 = vadd.s32 %v465, %v469
  %v476 = vadd.s32 %v468, %v474
  %vm477 = vc.u32 %v475, %v471
  %v478 = vsel %vm477, 1, 0
  %v479 = vadd.s32 %v475, %v471
  %v480 = vadd.s32 %v476, %v478
  %v481 = vadd.s32 %v480, %v470
  %v482 = vadd.s32 %v481, %v472
  %v483 = vand.u32 %v460, 65535
  %v484 = vshrl.u32 %v460, 16
  %v485 = vand.u32 %v455, 65535
  %v486 = vshrl.u32 %v455, 16
  %v487 = vmul.u32 %v483, %v485
  %v488 = vmul.u32 %v483, %v486
  %v489 = vmul.u32 %v484, %v485
  %v490 = vmul.u32 %v484, %v486
  %v491 = vshll.u32 %v488, 16
  %v492 = vshrl.u32 %v488, 16
  %v493 = vshll.u32 %v489, 16
  %v494 = vshrl.u32 %v489, 16
  %vm495 = vc.u32 %v487, %v491
  %v496 = vsel %vm495, 1, 0
  %v497 = vadd.s32 %v487, %v491
  %v498 = vadd.s32 %v490, %v496
  %vm499 = vc.u32 %v497, %v493
  %v500 = vsel %vm499, 1, 0
  %v501 = vadd.s32 %v497, %v493
  %v502 = vadd.s32 %v498, %v500
  %v503 = vadd.s32 %v502, %v492
  %v504 = vadd.s32 %v503, %v494
  %v505 = vmul.u32 %v460, %v451
  %v506 = vadd.s32 %v482, %v501
  %vm507 = vc.u32 %v482, %v501
  %v508 = vadd.s32 %v504, 1
  %v509 = vsel %vm507, %v508, %v504
  %v510 = vadd.s32 %v505, %v509
  %v511 = vadd.s32 %v510, 536870912
  %v512 = vshrl.u32 %v511, 30
  %v513 = vshll.u32 %v512, 30
  %v514 = vsub.s32 %v510, %v513
  %vm515 = vcmp.lt.s32.totalorder %v514, 0
  %v516 = vsub.s32 0, %v514
  %v517 = vsel %vm515, %v516, %v514
  %v518 = vclz %v517
  %v519 = vsub.s32 %v518, 2
  %vm520 = vcmp.gt.s32.totalorder 0, %v519
  %v521 = vsel %vm520, 0, %v519
  %v522 = vsub.s32 32, %v521
  %v523 = vshll.u32 %v514, %v521
  %v524 = vshrl.u32 %v506, %v522
  %v525 = vor.u32 %v523, %v524
  %v526 = vsub.s32 4294967266, %v521
  %v527 = vadd.s32 %v526, 127
  %v528 = vshll.u32 %v527, 23
  %v529 = vor.u32 4788187, %v528
  %v530 = vand.u32 2147483647, %v529
  %v532 = vcvt.s32.f32 %v525
  %v533 = vmul.f32 %v532, %v530
  %v534 = vxor.u32 %v533, 2147483648
  %v535 = vsel %vm414, %v534, %v533
  %v536 = vsub.s32 4, %v512
  %v537 = vsel %vm414, %v536, %v512
  %v538 = vsel %vm413, %v93, %v535
  %v539 = vsel %vm413, 0, %v537
  %v540 = vmul.f32 %v538, %v538
  %v541 = vmul.f32 %v540, -0.001358992
  %v542 = vadd.f32 %v541, 0.041655596
  %v543 = vmul.f32 %v540, %v542
  %v544 = vadd.f32 %v543, -0.4999988
  %v545 = vmul.f32 %v540, %v544
  %v546 = vadd.f32 1.0, %v545
  %v547 = vmul.f32 %v538, %v538
  %v548 = vmul.f32 %v547, -0.00019511016
  %v549 = vadd.f32 %v548, 0.008332121
  %v550 = vmul.f32 %v547, %v549
  %v551 = vadd.f32 %v550, -0.16666654
  %v552 = vmul.f32 %v547, %v551
  %v553 = vadd.f32 %v552, 1.0
  %v554 = vmul.f32 %v553, %v538
  %vm555 = vweird.f32 %v93
  %v556 = vadd.s32 %v539, 3
  %v557 = vand.u32 %v556, 3
  %vm558 = vcmp.lt.s32.totalorder %v557, 2
  %vm559 = vcmp.eq.s32.totalorder %v557, 0
  %v560 = vxor.u32 %v554, 2147483648
  %v561 = vsel %vm559, %v546, %v560
  %vm562 = vcmp.eq.s32.totalorder %v557, 2
  %v563 = vxor.u32 %v546, 2147483648
  %v564 = vsel %vm562, %v563, %v554
  %v565 = vsel %vm558, %v561, %v564
  %v566 = vsel %vm555, nan, %v565
  %v567 = vand.u32 2147483647, %v94
  %vm568 = vcmp.le.f32.partialorder %v567, 0.7853982
  %vm569 = vcmp.lt.s32.totalorder %v94, 0
  %v570 = vand.u32 %v94, 2139095040
  %v571 = vshrl.u32 %v570, 23
  %v572 = vsub.s32 %v571, 127
  %v573 = vand.u32 2147483647, %v94
  %v574 = vand.u32 %v573, 8388607
  %v575 = vor.u32 %v574, 8388608
  %v576 = vsub.s32 0, %v575
  %v577 = vadd.s32 %v572, 1
  %vm578 = vcmp.gt.s32.totalorder %v577, 0
  %v579 = vsel %vm578, %v577, 0
  %v580 = vshrl.u32 %v579, 5
  %v581 = vand.u32 %v579, 31
  %v582 = vsub.s32 32, %v581
  %v583 = vshrl.u32 683565275, %v582
  %v584 = vshll.u32 683565275, %v581
  %v585 = vshrl.u32 2475754826, %v582
  %v586 = vor.u32 %v584, %v585
  %v587 = vshll.u32 2475754826, %v581
  %v588 = vshrl.u32 2131351028, %v582
  %v589 = vor.u32 %v587, %v588
  %v590 = vshll.u32 2131351028, %v581
  %v591 = vshrl.u32 2102212464, %v582
  %v592 = vor.u32 %v590, %v591
  %v593 = vshll.u32 2102212464, %v581
  %v594 = vshrl.u32 920167782, %v582
  %v595 = vor.u32 %v593, %v594
  %v596 = vshll.u32 920167782, %v581
  %v597 = vshrl.u32 1326507024, %v582
  %v598 = vor.u32 %v596, %v597
  %vm599 = vcmp.lt.s32.totalorder %v580, 1
  %vm600 = vcmp.lt.s32.totalorder %v580, 2
  %vm601 = vcmp.lt.s32.totalorder %v580, 3
  %vm602 = vcmp.lt.s32.totalorder %v580, 4
  %v603 = vsel %vm599, %v583, %v586
  %v604 = vsel %vm602, %v592, 2102212464
  %v605 = vsel %vm601, %v589, %v604
  %v606 = vsel %vm600, %v603, %v605
  %v607 = vsel %vm599, %v586, %v589
  %v608 = vsel %vm602, %v595, 920167782
  %v609 = vsel %vm601, %v592, %v608
  %v610 = vsel %vm600, %v607, %v609
  %v611 = vsel %vm599, %v589, %v592
  %v612 = vsel %vm602, %v598, 1326507024
  %v613 = vsel %vm601, %v595, %v612
  %v614 = vsel %vm600, %v611, %v613
  %v615 = vshll.u32 %v575, 8
  %v616 = vand.u32 %v615, 65535
  %v617 = vshrl.u32 %v615, 16
  %v618 = vand.u32 %v614, 65535
  %v619 = vshrl.u32 %v614, 16
  %v620 = vmul.u32 %v616, %v618
  %v621 = vmul.u32 %v616, %v619
  %v622 = vmul.u32 %v617, %v618
  %v623 = vmul.u32 %v617, %v619
  %v624 = vshll.u32 %v621, 16
  %v625 = vshrl.u32 %v621, 16
  %v626 = vshll.u32 %v622, 16
  %v627 = vshrl.u32 %v622, 16
  %vm628 = vc.u32 %v620, %v624
  %v629 = vsel %vm628, 1, 0
  %v630 = vadd.s32 %v620, %v624
  %v631 = vadd.s32 %v623, %v629
  %vm632 = vc.u32 %v630, %v626
  %v633 = vsel %vm632, 1, 0
  %v634 = vadd.s32 %v630, %v626
  %v635 = vadd.s32 %v631, %v633
  %v636 = vadd.s32 %v635, %v625
  %v637 = vadd.s32 %v636, %v627
  %v638 = vand.u32 %v615, 65535
  %v639 = vshrl.u32 %v615, 16
  %v640 = vand.u32 %v610, 65535
  %v641 = vshrl.u32 %v610, 16
  %v642 = vmul.u32 %v638, %v640
  %v643 = vmul.u32 %v638, %v641
  %v644 = vmul.u32 %v639, %v640
  %v645 = vmul.u32 %v639, %v641
  %v646 = vshll.u32 %v643, 16
  %v647 = vshrl.u32 %v643, 16
  %v648 = vshll.u32 %v644, 16
  %v649 = vshrl.u32 %v644, 16
  %vm650 = vc.u32 %v642, %v646
  %v651 = vsel %vm650, 1, 0
  %v652 = vadd.s32 %v642, %v646
  %v653 = vadd.s32 %v645, %v651
  %vm654 = vc.u32 %v652, %v648
  %v655 = vsel %vm654, 1, 0
  %v656 = vadd.s32 %v652, %v648
  %v657 = vadd.s32 %v653, %v655
  %v658 = vadd.s32 %v657, %v647
  %v659 = vadd.s32 %v658, %v649
  %v660 = vmul.u32 %v615, %v606
  %v661 = vadd.s32 %v637, %v656
  %vm662 = vc.u32 %v637, %v656
  %v663 = vadd.s32 %v659, 1
  %v664 = vsel %vm662, %v663, %v659
  %v665 = vadd.s32 %v660, %v664
  %v666 = vadd.s32 %v665, 536870912
  %v667 = vshrl.u32 %v666, 30
  %v668 = vshll.u32 %v667, 30
  %v669 = vsub.s32 %v665, %v668
  %vm670 = vcmp.lt.s32.totalorder %v669, 0
  %v671 = vsub.s32 0, %v669
  %v672 = vsel %vm670, %v671, %v669
  %v673 = vclz %v672
  %v674 = vsub.s32 %v673, 2
  %vm675 = vcmp.gt.s32.totalorder 0, %v674
  %v676 = vsel %vm675, 0, %v674
  %v677 = vsub.s32 32, %v676
  %v678 = vshll.u32 %v669, %v676
  %v679 = vshrl.u32 %v661, %v677
  %v680 = vor.u32 %v678, %v679
  %v681 = vsub.s32 4294967266, %v676
  %v682 = vadd.s32 %v681, 127
  %v683 = vshll.u32 %v682, 23
  %v684 = vor.u32 4788187, %v683
  %v685 = vand.u32 2147483647, %v684
  %v687 = vcvt.s32.f32 %v680
  %v688 = vmul.f32 %v687, %v685
  %v689 = vxor.u32 %v688, 2147483648
  %v690 = vsel %vm569, %v689, %v688
  %v691 = vsub.s32 4, %v667
  %v692 = vsel %vm569, %v691, %v667
  %v693 = vsel %vm568, %v94, %v690
  %v694 = vsel %vm568, 0, %v692
  %v695 = vmul.f32 %v693, %v693
  %v696 = vmul.f32 %v695, -0.001358992
  %v697 = vadd.f32 %v696, 0.041655596
  %v698 = vmul.f32 %v695, %v697
  %v699 = vadd.f32 %v698, -0.4999988
  %v700 = vmul.f32 %v695, %v699
  %v701 = vadd.f32 1.0, %v700
  %v702 = vmul.f32 %v693, %v693
  %v703 = vmul.f32 %v702, -0.00019511016
  %v704 = vadd.f32 %v703, 0.008332121
  %v705 = vmul.f32 %v702, %v704
  %v706 = vadd.f32 %v705, -0.16666654
  %v707 = vmul.f32 %v702, %v706
  %v708 = vadd.f32 %v707, 1.0
  %v709 = vmul.f32 %v708, %v693
  %vm710 = vweird.f32 %v94
  %v711 = vadd.s32 %v694, 3
  %v712 = vand.u32 %v711, 3
  %vm713 = vcmp.lt.s32.totalorder %v712, 2
  %vm714 = vcmp.eq.s32.totalorder %v712, 0
  %v715 = vxor.u32 %v709, 2147483648
  %v716 = vsel %vm714, %v701, %v715
  %vm717 = vcmp.eq.s32.totalorder %v712, 2
  %v718 = vxor.u32 %v701, 2147483648
  %v719 = vsel %vm717, %v718, %v709
  %v720 = vsel %vm713, %v716, %v719
  %v721 = vsel %vm710, nan, %v720
  %v722 = vand.u32 2147483647, %v95
  %vm723 = vcmp.le.f32.partialorder %v722, 0.7853982
  %vm724 = vcmp.lt.s32.totalorder %v95, 0
  %v725 = vand.u32 %v95, 2139095040
  %v726 = vshrl.u32 %v725, 23
  %v727 = vsub.s32 %v726, 127
  %v728 = vand.u32 2147483647, %v95
  %v729 = vand.u32 %v728, 8388607
  %v730 = vor.u32 %v729, 8388608
  %v731 = vsub.s32 0, %v730
  %v732 = vadd.s32 %v727, 1
  %vm733 = vcmp.gt.s32.totalorder %v732, 0
  %v734 = vsel %vm733, %v732, 0
  %v735 = vshrl.u32 %v734, 5
  %v736 = vand.u32 %v734, 31
  %v737 = vsub.s32 32, %v736
  %v738 = vshrl.u32 683565275, %v737
  %v739 = vshll.u32 683565275, %v736
  %v740 = vshrl.u32 2475754826, %v737
  %v741 = vor.u32 %v739, %v740
  %v742 = vshll.u32 2475754826, %v736
  %v743 = vshrl.u32 2131351028, %v737
  %v744 = vor.u32 %v742, %v743
  %v745 = vshll.u32 2131351028, %v736
  %v746 = vshrl.u32 2102212464, %v737
  %v747 = vor.u32 %v745, %v746
  %v748 = vshll.u32 2102212464, %v736
  %v749 = vshrl.u32 920167782, %v737
  %v750 = vor.u32 %v748, %v749
  %v751 = vshll.u32 920167782, %v736
  %v752 = vshrl.u32 1326507024, %v737
  %v753 = vor.u32 %v751, %v752
  %vm754 = vcmp.lt.s32.totalorder %v735, 1
  %vm755 = vcmp.lt.s32.totalorder %v735, 2
  %vm756 = vcmp.lt.s32.totalorder %v735, 3
  %vm757 = vcmp.lt.s32.totalorder %v735, 4
  %v758 = vsel %vm754, %v738, %v741
  %v759 = vsel %vm757, %v747, 2102212464
  %v760 = vsel %vm756, %v744, %v759
  %v761 = vsel %vm755, %v758, %v760
  %v762 = vsel %vm754, %v741, %v744
  %v763 = vsel %vm757, %v750, 920167782
  %v764 = vsel %vm756, %v747, %v763
  %v765 = vsel %vm755, %v762, %v764
  %v766 = vsel %vm754, %v744, %v747
  %v767 = vsel %vm757, %v753, 1326507024
  %v768 = vsel %vm756, %v750, %v767
  %v769 = vsel %vm755, %v766, %v768
  %v770 = vshll.u32 %v730, 8
  %v771 = vand.u32 %v770, 65535
  %v772 = vshrl.u32 %v770, 16
  %v773 = vand.u32 %v769, 65535
  %v774 = vshrl.u32 %v769, 16
  %v775 = vmul.u32 %v771, %v773
  %v776 = vmul.u32 %v771, %v774
  %v777 = vmul.u32 %v772, %v773
  %v778 = vmul.u32 %v772, %v774
  %v779 = vshll.u32 %v776, 16
  %v780 = vshrl.u32 %v776, 16
  %v781 = vshll.u32 %v777, 16
  %v782 = vshrl.u32 %v777, 16
  %vm783 = vc.u32 %v775, %v779
  %v784 = vsel %vm783, 1, 0
  %v785 = vadd.s32 %v775, %v779
  %v786 = vadd.s32 %v778, %v784
  %vm787 = vc.u32 %v785, %v781
  %v788 = vsel %vm787, 1, 0
  %v789 = vadd.s32 %v785, %v781
  %v790 = vadd.s32 %v786, %v788
  %v791 = vadd.s32 %v790, %v780
  %v792 = vadd.s32 %v791, %v782
  %v793 = vand.u32 %v770, 65535
  %v794 = vshrl.u32 %v770, 16
  %v795 = vand.u32 %v765, 65535
  %v796 = vshrl.u32 %v765, 16
  %v797 = vmul.u32 %v793, %v795
  %v798 = vmul.u32 %v793, %v796
  %v799 = vmul.u32 %v794, %v795
  %v800 = vmul.u32 %v794, %v796
  %v801 = vshll.u32 %v798, 16
  %v802 = vshrl.u32 %v798, 16
  %v803 = vshll.u32 %v799, 16
  %v804 = vshrl.u32 %v799, 16
  %vm805 = vc.u32 %v797, %v801
  %v806 = vsel %vm805, 1, 0
  %v807 = vadd.s32 %v797, %v801
  %v808 = vadd.s32 %v800, %v806
  %vm809 = vc.u32 %v807, %v803
  %v810 = vsel %vm809, 1, 0
  %v811 = vadd.s32 %v807, %v803
  %v812 = vadd.s32 %v808, %v810
  %v813 = vadd.s32 %v812, %v802
  %v814 = vadd.s32 %v813, %v804
  %v815 = vmul.u32 %v770, %v761
  %v816 = vadd.s32 %v792, %v811
  %vm817 = vc.u32 %v792, %v811
  %v818 = vadd.s32 %v814, 1
  %v819 = vsel %vm817, %v818, %v814
  %v820 = vadd.s32 %v815, %v819
  %v821 = vadd.s32 %v820, 536870912
  %v822 = vshrl.u32 %v821, 30
  %v823 = vshll.u32 %v822, 30
  %v824 = vsub.s32 %v820, %v823
  %vm825 = vcmp.lt.s32.totalorder %v824, 0
  %v826 = vsub.s32 0, %v824
  %v827 = vsel %vm825, %v826, %v824
  %v828 = vclz %v827
  %v829 = vsub.s32 %v828, 2
  %vm830 = vcmp.gt.s32.totalorder 0, %v829
  %v831 = vsel %vm830, 0, %v829
  %v832 = vsub.s32 32, %v831
  %v833 = vshll.u32 %v824, %v831
  %v834 = vshrl.u32 %v816, %v832
  %v835 = vor.u32 %v833, %v834
  %v836 = vsub.s32 4294967266, %v831
  %v837 = vadd.s32 %v836, 127
  %v838 = vshll.u32 %v837, 23
  %v839 = vor.u32 4788187, %v838
  %v840 = vand.u32 2147483647, %v839
  %v842 = vcvt.s32.f32 %v835
  %v843 = vmul.f32 %v842, %v840
  %v844 = vxor.u32 %v843, 2147483648
  %v845 = vsel %vm724, %v844, %v843
  %v846 = vsub.s32 4, %v822
  %v847 = vsel %vm724, %v846, %v822
  %v848 = vsel %vm723, %v95, %v845
  %v849 = vsel %vm723, 0, %v847
  %v850 = vmul.f32 %v848, %v848
  %v851 = vmul.f32 %v850, -0.001358992
  %v852 = vadd.f32 %v851, 0.041655596
  %v853 = vmul.f32 %v850, %v852
  %v854 = vadd.f32 %v853, -0.4999988
  %v855 = vmul.f32 %v850, %v854
  %v856 = vadd.f32 1.0, %v855
  %v857 = vmul.f32 %v848, %v848
  %v858 = vmul.f32 %v857, -0.00019511016
  %v859 = vadd.f32 %v858, 0.008332121
  %v860 = vmul.f32 %v857, %v859
  %v861 = vadd.f32 %v860, -0.16666654
  %v862 = vmul.f32 %v857, %v861
  %v863 = vadd.f32 %v862, 1.0
  %v864 = vmul.f32 %v863, %v848
  %vm865 = vweird.f32 %v95
  %v866 = vadd.s32 %v849, 3
  %v867 = vand.u32 %v866, 3
  %vm868 = vcmp.lt.s32.totalorder %v867, 2
  %vm869 = vcmp.eq.s32.totalorder %v867, 0
  %v870 = vxor.u32 %v864, 2147483648
  %v871 = vsel %vm869, %v856, %v870
  %vm872 = vcmp.eq.s32.totalorder %v867, 2
  %v873 = vxor.u32 %v856, 2147483648
  %v874 = vsel %vm872, %v873, %v864
  %v875 = vsel %vm868, %v871, %v874
  %v876 = vsel %vm865, nan, %v875
  %v877 = vand.u32 2147483647, %v96
  %vm878 = vcmp.le.f32.partialorder %v877, 0.7853982
  %vm879 = vcmp.lt.s32.totalorder %v96, 0
  %v880 = vand.u32 %v96, 2139095040
  %v881 = vshrl.u32 %v880, 23
  %v882 = vsub.s32 %v881, 127
  %v883 = vand.u32 2147483647, %v96
  %v884 = vand.u32 %v883, 8388607
  %v885 = vor.u32 %v884, 8388608
  %v886 = vsub.s32 0, %v885
  %v887 = vadd.s32 %v882, 1
  %vm888 = vcmp.gt.s32.totalorder %v887, 0
  %v889 = vsel %vm888, %v887, 0
  %v890 = vshrl.u32 %v889, 5
  %v891 = vand.u32 %v889, 31
  %v892 = vsub.s32 32, %v891
  %v893 = vshrl.u32 683565275, %v892
  %v894 = vshll.u32 683565275, %v891
  %v895 = vshrl.u32 2475754826, %v892
  %v896 = vor.u32 %v894, %v895
  %v897 = vshll.u32 2475754826, %v891
  %v898 = vshrl.u32 2131351028, %v892
  %v899 = vor.u32 %v897, %v898
  %v900 = vshll.u32 2131351028, %v891
  %v901 = vshrl.u32 2102212464, %v892
  %v902 = vor.u32 %v900, %v901
  %v903 = vshll.u32 2102212464, %v891
  %v904 = vshrl.u32 920167782, %v892
  %v905 = vor.u32 %v903, %v904
  %v906 = vshll.u32 920167782, %v891
  %v907 = vshrl.u32 1326507024, %v892
  %v908 = vor.u32 %v906, %v907
  %vm909 = vcmp.lt.s32.totalorder %v890, 1
  %vm910 = vcmp.lt.s32.totalorder %v890, 2
  %vm911 = vcmp.lt.s32.totalorder %v890, 3
  %vm912 = vcmp.lt.s32.totalorder %v890, 4
  %v913 = vsel %vm909, %v893, %v896
  %v914 = vsel %vm912, %v902, 2102212464
  %v915 = vsel %vm911, %v899, %v914
  %v916 = vsel %vm910, %v913, %v915
  %v917 = vsel %vm909, %v896, %v899
  %v918 = vsel %vm912, %v905, 920167782
  %v919 = vsel %vm911, %v902, %v918
  %v920 = vsel %vm910, %v917, %v919
  %v921 = vsel %vm909, %v899, %v902
  %v922 = vsel %vm912, %v908, 1326507024
  %v923 = vsel %vm911, %v905, %v922
  %v924 = vsel %vm910, %v921, %v923
  %v925 = vshll.u32 %v885, 8
  %v926 = vand.u32 %v925, 65535
  %v927 = vshrl.u32 %v925, 16
  %v928 = vand.u32 %v924, 65535
  %v929 = vshrl.u32 %v924, 16
  %v930 = vmul.u32 %v926, %v928
  %v931 = vmul.u32 %v926, %v929
  %v932 = vmul.u32 %v927, %v928
  %v933 = vmul.u32 %v927, %v929
  %v934 = vshll.u32 %v931, 16
  %v935 = vshrl.u32 %v931, 16
  %v936 = vshll.u32 %v932, 16
  %v937 = vshrl.u32 %v932, 16
  %vm938 = vc.u32 %v930, %v934
  %v939 = vsel %vm938, 1, 0
  %v940 = vadd.s32 %v930, %v934
  %v941 = vadd.s32 %v933, %v939
  %vm942 = vc.u32 %v940, %v936
  %v943 = vsel %vm942, 1, 0
  %v944 = vadd.s32 %v940, %v936
  %v945 = vadd.s32 %v941, %v943
  %v946 = vadd.s32 %v945, %v935
  %v947 = vadd.s32 %v946, %v937
  %v948 = vand.u32 %v925, 65535
  %v949 = vshrl.u32 %v925, 16
  %v950 = vand.u32 %v920, 65535
  %v951 = vshrl.u32 %v920, 16
  %v952 = vmul.u32 %v948, %v950
  %v953 = vmul.u32 %v948, %v951
  %v954 = vmul.u32 %v949, %v950
  %v955 = vmul.u32 %v949, %v951
  %v956 = vshll.u32 %v953, 16
  %v957 = vshrl.u32 %v953, 16
  %v958 = vshll.u32 %v954, 16
  %v959 = vshrl.u32 %v954, 16
  %vm960 = vc.u32 %v952, %v956
  %v961 = vsel %vm960, 1, 0
  %v962 = vadd.s32 %v952, %v956
  %v963 = vadd.s32 %v955, %v961
  %vm964 = vc.u32 %v962, %v958
  %v965 = vsel %vm964, 1, 0
  %v966 = vadd.s32 %v962, %v958
  %v967 = vadd.s32 %v963, %v965
  %v968 = vadd.s32 %v967, %v957
  %v969 = vadd.s32 %v968, %v959
  %v970 = vmul.u32 %v925, %v916
  %v971 = vadd.s32 %v947, %v966
  %vm972 = vc.u32 %v947, %v966
  %v973 = vadd.s32 %v969, 1
  %v974 = vsel %vm972, %v973, %v969
  %v975 = vadd.s32 %v970, %v974
  %v976 = vadd.s32 %v975, 536870912
  %v977 = vshrl.u32 %v976, 30
  %v978 = vshll.u32 %v977, 30
  %v979 = vsub.s32 %v975, %v978
  %vm980 = vcmp.lt.s32.totalorder %v979, 0
  %v981 = vsub.s32 0, %v979
  %v982 = vsel %vm980, %v981, %v979
  %v983 = vclz %v982
  %v984 = vsub.s32 %v983, 2
  %vm985 = vcmp.gt.s32.totalorder 0, %v984
  %v986 = vsel %vm985, 0, %v984
  %v987 = vsub.s32 32, %v986
  %v988 = vshll.u32 %v979, %v986
  %v989 = vshrl.u32 %v971, %v987
  %v990 = vor.u32 %v988, %v989
  %v991 = vsub.s32 4294967266, %v986
  %v992 = vadd.s32 %v991, 127
  %v993 = vshll.u32 %v992, 23
  %v994 = vor.u32 4788187, %v993
  %v995 = vand.u32 2147483647, %v994
  %v997 = vcvt.s32.f32 %v990
  %v998 = vmul.f32 %v997, %v995
  %v999 = vxor.u32 %v998, 2147483648
  %v1000 = vsel %vm879, %v999, %v998
  %v1001 = vsub.s32 4, %v977
  %v1002 = vsel %vm879, %v1001, %v977
  %v1003 = vsel %vm878, %v96, %v1000
  %v1004 = vsel %vm878, 0, %v1002
  %v1005 = vmul.f32 %v1003, %v1003
  %v1006 = vmul.f32 %v1005, -0.001358992
  %v1007 = vadd.f32 %v1006, 0.041655596
  %v1008 = vmul.f32 %v1005, %v1007
  %v1009 = vadd.f32 %v1008, -0.4999988
  %v1010 = vmul.f32 %v1005, %v1009
  %v1011 = vadd.f32 1.0, %v1010
  %v1012 = vmul.f32 %v1003, %v1003
  %v1013 = vmul.f32 %v1012, -0.00019511016
  %v1014 = vadd.f32 %v1013, 0.008332121
  %v1015 = vmul.f32 %v1012, %v1014
  %v1016 = vadd.f32 %v1015, -0.16666654
  %v1017 = vmul.f32 %v1012, %v1016
  %v1018 = vadd.f32 %v1017, 1.0
  %v1019 = vmul.f32 %v1018, %v1003
  %vm1020 = vweird.f32 %v96
  %v1021 = vadd.s32 %v1004, 3
  %v1022 = vand.u32 %v1021, 3
  %vm1023 = vcmp.lt.s32.totalorder %v1022, 2
  %vm1024 = vcmp.eq.s32.totalorder %v1022, 0
  %v1025 = vxor.u32 %v1019, 2147483648
  %v1026 = vsel %vm1024, %v1011, %v1025
  %vm1027 = vcmp.eq.s32.totalorder %v1022, 2
  %v1028 = vxor.u32 %v1011, 2147483648
  %v1029 = vsel %vm1027, %v1028, %v1019
  %v1030 = vsel %vm1023, %v1026, %v1029
  %v1031 = vsel %vm1020, nan, %v1030
  %v1032 = vand.u32 2147483647, %v97
  %vm1033 = vcmp.le.f32.partialorder %v1032, 0.7853982
  %vm1034 = vcmp.lt.s32.totalorder %v97, 0
  %v1035 = vand.u32 %v97, 2139095040
  %v1036 = vshrl.u32 %v1035, 23
  %v1037 = vsub.s32 %v1036, 127
  %v1038 = vand.u32 2147483647, %v97
  %v1039 = vand.u32 %v1038, 8388607
  %v1040 = vor.u32 %v1039, 8388608
  %v1041 = vsub.s32 0, %v1040
  %v1042 = vadd.s32 %v1037, 1
  %vm1043 = vcmp.gt.s32.totalorder %v1042, 0
  %v1044 = vsel %vm1043, %v1042, 0
  %v1045 = vshrl.u32 %v1044, 5
  %v1046 = vand.u32 %v1044, 31
  %v1047 = vsub.s32 32, %v1046
  %v1048 = vshrl.u32 683565275, %v1047
  %v1049 = vshll.u32 683565275, %v1046
  %v1050 = vshrl.u32 2475754826, %v1047
  %v1051 = vor.u32 %v1049, %v1050
  %v1052 = vshll.u32 2475754826, %v1046
  %v1053 = vshrl.u32 2131351028, %v1047
  %v1054 = vor.u32 %v1052, %v1053
  %v1055 = vshll.u32 2131351028, %v1046
  %v1056 = vshrl.u32 2102212464, %v1047
  %v1057 = vor.u32 %v1055, %v1056
  %v1058 = vshll.u32 2102212464, %v1046
  %v1059 = vshrl.u32 920167782, %v1047
  %v1060 = vor.u32 %v1058, %v1059
  %v1061 = vshll.u32 920167782, %v1046
  %v1062 = vshrl.u32 1326507024, %v1047
  %v1063 = vor.u32 %v1061, %v1062
  %vm1064 = vcmp.lt.s32.totalorder %v1045, 1
  %vm1065 = vcmp.lt.s32.totalorder %v1045, 2
  %vm1066 = vcmp.lt.s32.totalorder %v1045, 3
  %vm1067 = vcmp.lt.s32.totalorder %v1045, 4
  %v1068 = vsel %vm1064, %v1048, %v1051
  %v1069 = vsel %vm1067, %v1057, 2102212464
  %v1070 = vsel %vm1066, %v1054, %v1069
  %v1071 = vsel %vm1065, %v1068, %v1070
  %v1072 = vsel %vm1064, %v1051, %v1054
  %v1073 = vsel %vm1067, %v1060, 920167782
  %v1074 = vsel %vm1066, %v1057, %v1073
  %v1075 = vsel %vm1065, %v1072, %v1074
  %v1076 = vsel %vm1064, %v1054, %v1057
  %v1077 = vsel %vm1067, %v1063, 1326507024
  %v1078 = vsel %vm1066, %v1060, %v1077
  %v1079 = vsel %vm1065, %v1076, %v1078
  %v1080 = vshll.u32 %v1040, 8
  %v1081 = vand.u32 %v1080, 65535
  %v1082 = vshrl.u32 %v1080, 16
  %v1083 = vand.u32 %v1079, 65535
  %v1084 = vshrl.u32 %v1079, 16
  %v1085 = vmul.u32 %v1081, %v1083
  %v1086 = vmul.u32 %v1081, %v1084
  %v1087 = vmul.u32 %v1082, %v1083
  %v1088 = vmul.u32 %v1082, %v1084
  %v1089 = vshll.u32 %v1086, 16
  %v1090 = vshrl.u32 %v1086, 16
  %v1091 = vshll.u32 %v1087, 16
  %v1092 = vshrl.u32 %v1087, 16
  %vm1093 = vc.u32 %v1085, %v1089
  %v1094 = vsel %vm1093, 1, 0
  %v1095 = vadd.s32 %v1085, %v1089
  %v1096 = vadd.s32 %v1088, %v1094
  %vm1097 = vc.u32 %v1095, %v1091
  %v1098 = vsel %vm1097, 1, 0
  %v1099 = vadd.s32 %v1095, %v1091
  %v1100 = vadd.s32 %v1096, %v1098
  %v1101 = vadd.s32 %v1100, %v1090
  %v1102 = vadd.s32 %v1101, %v1092
  %v1103 = vand.u32 %v1080, 65535
  %v1104 = vshrl.u32 %v1080, 16
  %v1105 = vand.u32 %v1075, 65535
  %v1106 = vshrl.u32 %v1075, 16
  %v1107 = vmul.u32 %v1103, %v1105
  %v1108 = vmul.u32 %v1103, %v1106
  %v1109 = vmul.u32 %v1104, %v1105
  %v1110 = vmul.u32 %v1104, %v1106
  %v1111 = vshll.u32 %v1108, 16
  %v1112 = vshrl.u32 %v1108, 16
  %v1113 = vshll.u32 %v1109, 16
  %v1114 = vshrl.u32 %v1109, 16
  %vm1115 = vc.u32 %v1107, %v1111
  %v1116 = vsel %vm1115, 1, 0
  %v1117 = vadd.s32 %v1107, %v1111
  %v1118 = vadd.s32 %v1110, %v1116
  %vm1119 = vc.u32 %v1117, %v1113
  %v1120 = vsel %vm1119, 1, 0
  %v1121 = vadd.s32 %v1117, %v1113
  %v1122 = vadd.s32 %v1118, %v1120
  %v1123 = vadd.s32 %v1122, %v1112
  %v1124 = vadd.s32 %v1123, %v1114
  %v1125 = vmul.u32 %v1080, %v1071
  %v1126 = vadd.s32 %v1102, %v1121
  %vm1127 = vc.u32 %v1102, %v1121
  %v1128 = vadd.s32 %v1124, 1
  %v1129 = vsel %vm1127, %v1128, %v1124
  %v1130 = vadd.s32 %v1125, %v1129
  %v1131 = vadd.s32 %v1130, 536870912
  %v1132 = vshrl.u32 %v1131, 30
  %v1133 = vshll.u32 %v1132, 30
  %v1134 = vsub.s32 %v1130, %v1133
  %vm1135 = vcmp.lt.s32.totalorder %v1134, 0
  %v1136 = vsub.s32 0, %v1134
  %v1137 = vsel %vm1135, %v1136, %v1134
  %v1138 = vclz %v1137
  %v1139 = vsub.s32 %v1138, 2
  %vm1140 = vcmp.gt.s32.totalorder 0, %v1139
  %v1141 = vsel %vm1140, 0, %v1139
  %v1142 = vsub.s32 32, %v1141
  %v1143 = vshll.u32 %v1134, %v1141
  %v1144 = vshrl.u32 %v1126, %v1142
  %v1145 = vor.u32 %v1143, %v1144
  %v1146 = vsub.s32 4294967266, %v1141
  %v1147 = vadd.s32 %v1146, 127
  %v1148 = vshll.u32 %v1147, 23
  %v1149 = vor.u32 4788187, %v1148
  %v1150 = vand.u32 2147483647, %v1149
  %v1152 = vcvt.s32.f32 %v1145
  %v1153 = vmul.f32 %v1152, %v1150
  %v1154 = vxor.u32 %v1153, 2147483648
  %v1155 = vsel %vm1034, %v1154, %v1153
  %v1156 = vsub.s32 4, %v1132
  %v1157 = vsel %vm1034, %v1156, %v1132
  %v1158 = vsel %vm1033, %v97, %v1155
  %v1159 = vsel %vm1033, 0, %v1157
  %v1160 = vmul.f32 %v1158, %v1158
  %v1161 = vmul.f32 %v1160, -0.001358992
  %v1162 = vadd.f32 %v1161, 0.041655596
  %v1163 = vmul.f32 %v1160, %v1162
  %v1164 = vadd.f32 %v1163, -0.4999988
  %v1165 = vmul.f32 %v1160, %v1164
  %v1166 = vadd.f32 1.0, %v1165
  %v1167 = vmul.f32 %v1158, %v1158
  %v1168 = vmul.f32 %v1167, -0.00019511016
  %v1169 = vadd.f32 %v1168, 0.008332121
  %v1170 = vmul.f32 %v1167, %v1169
  %v1171 = vadd.f32 %v1170, -0.16666654
  %v1172 = vmul.f32 %v1167, %v1171
  %v1173 = vadd.f32 %v1172, 1.0
  %v1174 = vmul.f32 %v1173, %v1158
  %vm1175 = vweird.f32 %v97
  %v1176 = vadd.s32 %v1159, 3
  %v1177 = vand.u32 %v1176, 3
  %vm1178 = vcmp.lt.s32.totalorder %v1177, 2
  %vm1179 = vcmp.eq.s32.totalorder %v1177, 0
  %v1180 = vxor.u32 %v1174, 2147483648
  %v1181 = vsel %vm1179, %v1166, %v1180
  %vm1182 = vcmp.eq.s32.totalorder %v1177, 2
  %v1183 = vxor.u32 %v1166, 2147483648
  %v1184 = vsel %vm1182, %v1183, %v1174
  %v1185 = vsel %vm1178, %v1181, %v1184
  %v1186 = vsel %vm1175, nan, %v1185
  %v1187 = vand.u32 2147483647, %v98
  %vm1188 = vcmp.le.f32.partialorder %v1187, 0.7853982
  %vm1189 = vcmp.lt.s32.totalorder %v98, 0
  %v1190 = vand.u32 %v98, 2139095040
  %v1191 = vshrl.u32 %v1190, 23
  %v1192 = vsub.s32 %v1191, 127
  %v1193 = vand.u32 2147483647, %v98
  %v1194 = vand.u32 %v1193, 8388607
  %v1195 = vor.u32 %v1194, 8388608
  %v1196 = vsub.s32 0, %v1195
  %v1197 = vadd.s32 %v1192, 1
  %vm1198 = vcmp.gt.s32.totalorder %v1197, 0
  %v1199 = vsel %vm1198, %v1197, 0
  %v1200 = vshrl.u32 %v1199, 5
  %v1201 = vand.u32 %v1199, 31
  %v1202 = vsub.s32 32, %v1201
  %v1203 = vshrl.u32 683565275, %v1202
  %v1204 = vshll.u32 683565275, %v1201
  %v1205 = vshrl.u32 2475754826, %v1202
  %v1206 = vor.u32 %v1204, %v1205
  %v1207 = vshll.u32 2475754826, %v1201
  %v1208 = vshrl.u32 2131351028, %v1202
  %v1209 = vor.u32 %v1207, %v1208
  %v1210 = vshll.u32 2131351028, %v1201
  %v1211 = vshrl.u32 2102212464, %v1202
  %v1212 = vor.u32 %v1210, %v1211
  %v1213 = vshll.u32 2102212464, %v1201
  %v1214 = vshrl.u32 920167782, %v1202
  %v1215 = vor.u32 %v1213, %v1214
  %v1216 = vshll.u32 920167782, %v1201
  %v1217 = vshrl.u32 1326507024, %v1202
  %v1218 = vor.u32 %v1216, %v1217
  %vm1219 = vcmp.lt.s32.totalorder %v1200, 1
  %vm1220 = vcmp.lt.s32.totalorder %v1200, 2
  %vm1221 = vcmp.lt.s32.totalorder %v1200, 3
  %vm1222 = vcmp.lt.s32.totalorder %v1200, 4
  %v1223 = vsel %vm1219, %v1203, %v1206
  %v1224 = vsel %vm1222, %v1212, 2102212464
  %v1225 = vsel %vm1221, %v1209, %v1224
  %v1226 = vsel %vm1220, %v1223, %v1225
  %v1227 = vsel %vm1219, %v1206, %v1209
  %v1228 = vsel %vm1222, %v1215, 920167782
  %v1229 = vsel %vm1221, %v1212, %v1228
  %v1230 = vsel %vm1220, %v1227, %v1229
  %v1231 = vsel %vm1219, %v1209, %v1212
  %v1232 = vsel %vm1222, %v1218, 1326507024
  %v1233 = vsel %vm1221, %v1215, %v1232
  %v1234 = vsel %vm1220, %v1231, %v1233
  %v1235 = vshll.u32 %v1195, 8
  %v1236 = vand.u32 %v1235, 65535
  %v1237 = vshrl.u32 %v1235, 16
  %v1238 = vand.u32 %v1234, 65535
  %v1239 = vshrl.u32 %v1234, 16
  %v1240 = vmul.u32 %v1236, %v1238
  %v1241 = vmul.u32 %v1236, %v1239
  %v1242 = vmul.u32 %v1237, %v1238
  %v1243 = vmul.u32 %v1237, %v1239
  %v1244 = vshll.u32 %v1241, 16
  %v1245 = vshrl.u32 %v1241, 16
  %v1246 = vshll.u32 %v1242, 16
  %v1247 = vshrl.u32 %v1242, 16
  %vm1248 = vc.u32 %v1240, %v1244
  %v1249 = vsel %vm1248, 1, 0
  %v1250 = vadd.s32 %v1240, %v1244
  %v1251 = vadd.s32 %v1243, %v1249
  %vm1252 = vc.u32 %v1250, %v1246
  %v1253 = vsel %vm1252, 1, 0
  %v1254 = vadd.s32 %v1250, %v1246
  %v1255 = vadd.s32 %v1251, %v1253
  %v1256 = vadd.s32 %v1255, %v1245
  %v1257 = vadd.s32 %v1256, %v1247
  %v1258 = vand.u32 %v1235, 65535
  %v1259 = vshrl.u32 %v1235, 16
  %v1260 = vand.u32 %v1230, 65535
  %v1261 = vshrl.u32 %v1230, 16
  %v1262 = vmul.u32 %v1258, %v1260
  %v1263 = vmul.u32 %v1258, %v1261
  %v1264 = vmul.u32 %v1259, %v1260
  %v1265 = vmul.u32 %v1259, %v1261
  %v1266 = vshll.u32 %v1263, 16
  %v1267 = vshrl.u32 %v1263, 16
  %v1268 = vshll.u32 %v1264, 16
  %v1269 = vshrl.u32 %v1264, 16
  %vm1270 = vc.u32 %v1262, %v1266
  %v1271 = vsel %vm1270, 1, 0
  %v1272 = vadd.s32 %v1262, %v1266
  %v1273 = vadd.s32 %v1265, %v1271
  %vm1274 = vc.u32 %v1272, %v1268
  %v1275 = vsel %vm1274, 1, 0
  %v1276 = vadd.s32 %v1272, %v1268
  %v1277 = vadd.s32 %v1273, %v1275
  %v1278 = vadd.s32 %v1277, %v1267
  %v1279 = vadd.s32 %v1278, %v1269
  %v1280 = vmul.u32 %v1235, %v1226
  %v1281 = vadd.s32 %v1257, %v1276
  %vm1282 = vc.u32 %v1257, %v1276
  %v1283 = vadd.s32 %v1279, 1
  %v1284 = vsel %vm1282, %v1283, %v1279
  %v1285 = vadd.s32 %v1280, %v1284
  %v1286 = vadd.s32 %v1285, 536870912
  %v1287 = vshrl.u32 %v1286, 30
  %v1288 = vshll.u32 %v1287, 30
  %v1289 = vsub.s32 %v1285, %v1288
  %vm1290 = vcmp.lt.s32.totalorder %v1289, 0
  %v1291 = vsub.s32 0, %v1289
  %v1292 = vsel %vm1290, %v1291, %v1289
  %v1293 = vclz %v1292
  %v1294 = vsub.s32 %v1293, 2
  %vm1295 = vcmp.gt.s32.totalorder 0, %v1294
  %v1296 = vsel %vm1295, 0, %v1294
  %v1297 = vsub.s32 32, %v1296
  %v1298 = vshll.u32 %v1289, %v1296
  %v1299 = vshrl.u32 %v1281, %v1297
  %v1300 = vor.u32 %v1298, %v1299
  %v1301 = vsub.s32 4294967266, %v1296
  %v1302 = vadd.s32 %v1301, 127
  %v1303 = vshll.u32 %v1302, 23
  %v1304 = vor.u32 4788187, %v1303
  %v1305 = vand.u32 2147483647, %v1304
  %v1307 = vcvt.s32.f32 %v1300
  %v1308 = vmul.f32 %v1307, %v1305
  %v1309 = vxor.u32 %v1308, 2147483648
  %v1310 = vsel %vm1189, %v1309, %v1308
  %v1311 = vsub.s32 4, %v1287
  %v1312 = vsel %vm1189, %v1311, %v1287
  %v1313 = vsel %vm1188, %v98, %v1310
  %v1314 = vsel %vm1188, 0, %v1312
  %v1315 = vmul.f32 %v1313, %v1313
  %v1316 = vmul.f32 %v1315, -0.001358992
  %v1317 = vadd.f32 %v1316, 0.041655596
  %v1318 = vmul.f32 %v1315, %v1317
  %v1319 = vadd.f32 %v1318, -0.4999988
  %v1320 = vmul.f32 %v1315, %v1319
  %v1321 = vadd.f32 1.0, %v1320
  %v1322 = vmul.f32 %v1313, %v1313
  %v1323 = vmul.f32 %v1322, -0.00019511016
  %v1324 = vadd.f32 %v1323, 0.008332121
  %v1325 = vmul.f32 %v1322, %v1324
  %v1326 = vadd.f32 %v1325, -0.16666654
  %v1327 = vmul.f32 %v1322, %v1326
  %v1328 = vadd.f32 %v1327, 1.0
  %v1329 = vmul.f32 %v1328, %v1313
  %vm1330 = vweird.f32 %v98
  %v1331 = vadd.s32 %v1314, 3
  %v1332 = vand.u32 %v1331, 3
  %vm1333 = vcmp.lt.s32.totalorder %v1332, 2
  %vm1334 = vcmp.eq.s32.totalorder %v1332, 0
  %v1335 = vxor.u32 %v1329, 2147483648
  %v1336 = vsel %vm1334, %v1321, %v1335
  %vm1337 = vcmp.eq.s32.totalorder %v1332, 2
  %v1338 = vxor.u32 %v1321, 2147483648
  %v1339 = vsel %vm1337, %v1338, %v1329
  %v1340 = vsel %vm1333, %v1336, %v1339
  %v1341 = vsel %vm1330, nan, %v1340
  %v1342 = vsel %vm101, %v256, %v91
  %v1343 = vsel %vm101, %v411, %v92
  %v1344 = vsel %vm101, %v566, %v93
  %v1345 = vsel %vm101, %v721, %v94
  %v1346 = vsel %vm101, %v876, %v95
  %v1347 = vsel %vm101, %v1031, %v96
  %v1348 = vsel %vm101, %v1186, %v97
  %v1349 = vsel %vm101, %v1341, %v98
  %v1350 = vperm.slane %v17, 0
  %vm1351 = vcmask 261120
  %v1353 = vsel %vm1351, %v1342, 0
  %v1356 = vsel %vm1351, %v1343, 0
  %v1359 = vsel %vm1351, %v1344, 0
  %v1362 = vsel %vm1351, %v1345, 0
  %v1365 = vsel %vm1351, %v1346, 0
  %v1368 = vsel %vm1351, %v1347, 0
  %v1371 = vsel %vm1351, %v1348, 0
  %v1374 = vsel %vm1351, %v1349, 0
  %1376 = vmatpush.msra.mxu0 0.0
  %1377 = vmatpush.msra.mxu0 0.0
  %1378 = vmatpush.msra.mxu0 0.0
  %1379 = vmatpush.msra.mxu0 0.0
  %1380 = vmatpush.msra.mxu0 0.0
  %1381 = vmatpush.msra.mxu0 0.0
  %1382 = vmatpush.msra.mxu0 0.0
  %1383 = vmatpush.msra.mxu0 0.0
  %1384 = vmatpush.msra.mxu0 0.0
  %1385 = vmatpush.msra.mxu0 0.0
  %1386 = vmatpush.msra.mxu0 0.0
  %1387 = vmatpush.msra.mxu0 0.0
  %1388 = vmatpush.msra.mxu0 %v22
  %1389 = vmatpush.msra.mxu0 %v21
  %1390 = vmatpush.msra.mxu0 %v20
  %1391 = vmatpush.msra.mxu0 %v19
  %1392 = vmatmul.f32.gmra.mxu0 %v1353
  %v1393 = vpop.f32.mrf.mxu0
  %v1394 = vadd.f32 %v1350, %v1393
  %1395 = vmatmul.f32.gmra.mxu0 %v1356
  %v1396 = vpop.f32.mrf.mxu0
  %v1397 = vadd.f32 %v1350, %v1396
  %1398 = vmatmul.f32.gmra.mxu0 %v1359
  %v1399 = vpop.f32.mrf.mxu0
  %v1400 = vadd.f32 %v1350, %v1399
  %1401 = vmatmul.f32.gmra.mxu0 %v1362
  %v1402 = vpop.f32.mrf.mxu0
  %v1403 = vadd.f32 %v1350, %v1402
  %1404 = vmatmul.f32.gmra.mxu0 %v1365
  %v1405 = vpop.f32.mrf.mxu0
  %v1406 = vadd.f32 %v1350, %v1405
  %1407 = vmatmul.f32.gmra.mxu0 %v1368
  %v1408 = vpop.f32.mrf.mxu0
  %v1409 = vadd.f32 %v1350, %v1408
  %1410 = vmatmul.f32.gmra.mxu0 %v1371
  %v1411 = vpop.f32.mrf.mxu0
  %v1412 = vadd.f32 %v1350, %v1411
  %1413 = vmatmul.f32.gmra.mxu0 %v1374
  %v1414 = vpop.f32.mrf.mxu0
  %v1415 = vadd.f32 %v1350, %v1414
  %1416 = vdwg.mxu0
  %vm1417 = vcmp.ge.s32.totalorder %v100, 64
  %vm1418 = vcmp.lt.s32.totalorder %v100, 96
  %vm1419 = vmand %vm1417, %vm1418
  %v1420 = vsel %vm1419, 1.0, 0.5
  %v1421 = vsel %vm1419, 0.0, 0.5
  %v1423 = vsel %vm1351, 0, 0
  %1425 = vmatpush.bf16.msra.mxu0 0
  %1426 = vmatpush.bf16.msra.mxu0 0
  %1427 = vmatpush.bf16.msra.mxu0 0
  %1428 = vmatpush.bf16.msra.mxu0 0
  %1429 = vmatpush.bf16.msra.mxu0 0
  %1430 = vmatpush.bf16.msra.mxu0 0
  %1431 = vmatpush.bf16.msra.mxu0 %v28
  %1432 = vmatpush.bf16.msra.mxu0 %v27
  %1433 = vmatmul.bf16.gmra.mxu0 %v1423
  %v1434 = vpop.f32.mrf.mxu0
  %v1435 = vadd.f32 0.0, %v1434
  %v1436 = vpop.f32.mrf.mxu0
  %1437 = vdwg.mxu0
  %v1438 = vadd.f32 %v1394, %v1435
  %v1439 = vtanh.pop %v1438
  %v1440 = vmul.f32 %v1439, %v1420
  %v1441 = vadd.f32 %v1440, %v1421
  %v1442 = vmul.f32 %v1441, 0.0
  %1444 = vrot.lane.b32.xlu0 %v1441, 64
  %v1445 = vpop.permute.xlu0 %1444
  %v1447 = vmul.f32 %v1441, %v1445
  %1449 = vrot.lane.b32.xlu0 %v1447, 32
  %v1450 = vpop.permute.xlu0 %1449
  %v1452 = vadd.f32 %v1442, %v1450
  %v1453 = vtanh.pop %v1452
  %1455 = vrot.lane.b32.xlu0 %v1453, 64
  %v1456 = vpop.permute.xlu0 %1455
  %v1458 = vmul.f32 %v1441, %v1456
  %v1459 = vpack.c.bf16 %v1458, %v1458
  %1461 = vrot.lane.b32.xlu0 %v1459, 32
  %v1462 = vpop.permute.xlu0 %1461
  %v1464 = vsel %vm1351, %v1462, 0
  %1466 = vmatpush.bf16.msra.mxu0 0
  %1467 = vmatpush.bf16.msra.mxu0 0
  %1468 = vmatpush.bf16.msra.mxu0 0
  %1469 = vmatpush.bf16.msra.mxu0 0
  %1470 = vmatpush.bf16.msra.mxu0 0
  %1471 = vmatpush.bf16.msra.mxu0 0
  %1472 = vmatpush.bf16.msra.mxu0 %v28
  %1473 = vmatpush.bf16.msra.mxu0 %v27
  %1474 = vmatmul.bf16.gmra.mxu0 %v1464
  %v1475 = vpop.f32.mrf.mxu0
  %v1476 = vadd.f32 0.0, %v1475
  %v1477 = vpop.f32.mrf.mxu0
  %1478 = vdwg.mxu0
  %v1479 = vadd.f32 %v1397, %v1476
  %v1480 = vtanh.pop %v1479
  %v1481 = vmul.f32 %v1480, %v1420
  %v1482 = vadd.f32 %v1481, %v1421
  %v1483 = vmul.f32 %v1482, %v1452
  %1485 = vrot.lane.b32.xlu0 %v1482, 64
  %v1486 = vpop.permute.xlu0 %1485
  %v1488 = vmul.f32 %v1482, %v1486
  %1490 = vrot.lane.b32.xlu0 %v1488, 32
  %v1491 = vpop.permute.xlu0 %1490
  %v1493 = vadd.f32 %v1483, %v1491
  %v1494 = vtanh.pop %v1493
  %1496 = vrot.lane.b32.xlu0 %v1494, 64
  %v1497 = vpop.permute.xlu0 %1496
  %v1499 = vmul.f32 %v1482, %v1497
  %v1500 = vpack.c.bf16 %v1499, %v1499
  %1502 = vrot.lane.b32.xlu0 %v1500, 32
  %v1503 = vpop.permute.xlu0 %1502
  %v1505 = vsel %vm1351, %v1503, 0
  %1507 = vmatpush.bf16.msra.mxu0 0
  %1508 = vmatpush.bf16.msra.mxu0 0
  %1509 = vmatpush.bf16.msra.mxu0 0
  %1510 = vmatpush.bf16.msra.mxu0 0
  %1511 = vmatpush.bf16.msra.mxu0 0
  %1512 = vmatpush.bf16.msra.mxu0 0
  %1513 = vmatpush.bf16.msra.mxu0 %v28
  %1514 = vmatpush.bf16.msra.mxu0 %v27
  %1515 = vmatmul.bf16.gmra.mxu0 %v1505
  %v1516 = vpop.f32.mrf.mxu0
  %v1517 = vadd.f32 0.0, %v1516
  %v1518 = vpop.f32.mrf.mxu0
  %1519 = vdwg.mxu0
  %v1520 = vadd.f32 %v1400, %v1517
  %v1521 = vtanh.pop %v1520
  %v1522 = vmul.f32 %v1521, %v1420
  %v1523 = vadd.f32 %v1522, %v1421
  %v1524 = vmul.f32 %v1523, %v1493
  %1526 = vrot.lane.b32.xlu0 %v1523, 64
  %v1527 = vpop.permute.xlu0 %1526
  %v1529 = vmul.f32 %v1523, %v1527
  %1531 = vrot.lane.b32.xlu0 %v1529, 32
  %v1532 = vpop.permute.xlu0 %1531
  %v1534 = vadd.f32 %v1524, %v1532
  %v1535 = vtanh.pop %v1534
  %1537 = vrot.lane.b32.xlu0 %v1535, 64
  %v1538 = vpop.permute.xlu0 %1537
  %v1540 = vmul.f32 %v1523, %v1538
  %v1541 = vpack.c.bf16 %v1540, %v1540
  %1543 = vrot.lane.b32.xlu0 %v1541, 32
  %v1544 = vpop.permute.xlu0 %1543
  %v1546 = vsel %vm1351, %v1544, 0
  %1548 = vmatpush.bf16.msra.mxu0 0
  %1549 = vmatpush.bf16.msra.mxu0 0
  %1550 = vmatpush.bf16.msra.mxu0 0
  %1551 = vmatpush.bf16.msra.mxu0 0
  %1552 = vmatpush.bf16.msra.mxu0 0
  %1553 = vmatpush.bf16.msra.mxu0 0
  %1554 = vmatpush.bf16.msra.mxu0 %v28
  %1555 = vmatpush.bf16.msra.mxu0 %v27
  %1556 = vmatmul.bf16.gmra.mxu0 %v1546
  %v1557 = vpop.f32.mrf.mxu0
  %v1558 = vadd.f32 0.0, %v1557
  %v1559 = vpop.f32.mrf.mxu0
  %1560 = vdwg.mxu0
  %v1561 = vadd.f32 %v1403, %v1558
  %v1562 = vtanh.pop %v1561
  %v1563 = vmul.f32 %v1562, %v1420
  %v1564 = vadd.f32 %v1563, %v1421
  %v1565 = vmul.f32 %v1564, %v1534
  %1567 = vrot.lane.b32.xlu0 %v1564, 64
  %v1568 = vpop.permute.xlu0 %1567
  %v1570 = vmul.f32 %v1564, %v1568
  %1572 = vrot.lane.b32.xlu0 %v1570, 32
  %v1573 = vpop.permute.xlu0 %1572
  %v1575 = vadd.f32 %v1565, %v1573
  %v1576 = vtanh.pop %v1575
  %1578 = vrot.lane.b32.xlu0 %v1576, 64
  %v1579 = vpop.permute.xlu0 %1578
  %v1581 = vmul.f32 %v1564, %v1579
  %v1582 = vpack.c.bf16 %v1581, %v1581
  %1584 = vrot.lane.b32.xlu0 %v1582, 32
  %v1585 = vpop.permute.xlu0 %1584
  %v1587 = vsel %vm1351, %v1585, 0
  %1589 = vmatpush.bf16.msra.mxu0 0
  %1590 = vmatpush.bf16.msra.mxu0 0
  %1591 = vmatpush.bf16.msra.mxu0 0
  %1592 = vmatpush.bf16.msra.mxu0 0
  %1593 = vmatpush.bf16.msra.mxu0 0
  %1594 = vmatpush.bf16.msra.mxu0 0
  %1595 = vmatpush.bf16.msra.mxu0 %v28
  %1596 = vmatpush.bf16.msra.mxu0 %v27
  %1597 = vmatmul.bf16.gmra.mxu0 %v1587
  %v1598 = vpop.f32.mrf.mxu0
  %v1599 = vadd.f32 0.0, %v1598
  %v1600 = vpop.f32.mrf.mxu0
  %1601 = vdwg.mxu0
  %v1602 = vadd.f32 %v1406, %v1599
  %v1603 = vtanh.pop %v1602
  %v1604 = vmul.f32 %v1603, %v1420
  %v1605 = vadd.f32 %v1604, %v1421
  %v1606 = vmul.f32 %v1605, %v1575
  %1608 = vrot.lane.b32.xlu0 %v1605, 64
  %v1609 = vpop.permute.xlu0 %1608
  %v1611 = vmul.f32 %v1605, %v1609
  %1613 = vrot.lane.b32.xlu0 %v1611, 32
  %v1614 = vpop.permute.xlu0 %1613
  %v1616 = vadd.f32 %v1606, %v1614
  %v1617 = vtanh.pop %v1616
  %1619 = vrot.lane.b32.xlu0 %v1617, 64
  %v1620 = vpop.permute.xlu0 %1619
  %v1622 = vmul.f32 %v1605, %v1620
  %v1623 = vpack.c.bf16 %v1622, %v1622
  %1625 = vrot.lane.b32.xlu0 %v1623, 32
  %v1626 = vpop.permute.xlu0 %1625
  %v1628 = vsel %vm1351, %v1626, 0
  %1630 = vmatpush.bf16.msra.mxu0 0
  %1631 = vmatpush.bf16.msra.mxu0 0
  %1632 = vmatpush.bf16.msra.mxu0 0
  %1633 = vmatpush.bf16.msra.mxu0 0
  %1634 = vmatpush.bf16.msra.mxu0 0
  %1635 = vmatpush.bf16.msra.mxu0 0
  %1636 = vmatpush.bf16.msra.mxu0 %v28
  %1637 = vmatpush.bf16.msra.mxu0 %v27
  %1638 = vmatmul.bf16.gmra.mxu0 %v1628
  %v1639 = vpop.f32.mrf.mxu0
  %v1640 = vadd.f32 0.0, %v1639
  %v1641 = vpop.f32.mrf.mxu0
  %1642 = vdwg.mxu0
  %v1643 = vadd.f32 %v1409, %v1640
  %v1644 = vtanh.pop %v1643
  %v1645 = vmul.f32 %v1644, %v1420
  %v1646 = vadd.f32 %v1645, %v1421
  %v1647 = vmul.f32 %v1646, %v1616
  %1649 = vrot.lane.b32.xlu0 %v1646, 64
  %v1650 = vpop.permute.xlu0 %1649
  %v1652 = vmul.f32 %v1646, %v1650
  %1654 = vrot.lane.b32.xlu0 %v1652, 32
  %v1655 = vpop.permute.xlu0 %1654
  %v1657 = vadd.f32 %v1647, %v1655
  %v1658 = vtanh.pop %v1657
  %1660 = vrot.lane.b32.xlu0 %v1658, 64
  %v1661 = vpop.permute.xlu0 %1660
  %v1663 = vmul.f32 %v1646, %v1661
  %v1664 = vpack.c.bf16 %v1663, %v1663
  %1666 = vrot.lane.b32.xlu0 %v1664, 32
  %v1667 = vpop.permute.xlu0 %1666
  %v1669 = vsel %vm1351, %v1667, 0
  %1671 = vmatpush.bf16.msra.mxu0 0
  %1672 = vmatpush.bf16.msra.mxu0 0
  %1673 = vmatpush.bf16.msra.mxu0 0
  %1674 = vmatpush.bf16.msra.mxu0 0
  %1675 = vmatpush.bf16.msra.mxu0 0
  %1676 = vmatpush.bf16.msra.mxu0 0
  %1677 = vmatpush.bf16.msra.mxu0 %v28
  %1678 = vmatpush.bf16.msra.mxu0 %v27
  %1679 = vmatmul.bf16.gmra.mxu0 %v1669
  %v1680 = vpop.f32.mrf.mxu0
  %v1681 = vadd.f32 0.0, %v1680
  %v1682 = vpop.f32.mrf.mxu0
  %1683 = vdwg.mxu0
  %v1684 = vadd.f32 %v1412, %v1681
  %v1685 = vtanh.pop %v1684
  %v1686 = vmul.f32 %v1685, %v1420
  %v1687 = vadd.f32 %v1686, %v1421
  %v1688 = vmul.f32 %v1687, %v1657
  %1690 = vrot.lane.b32.xlu0 %v1687, 64
  %v1691 = vpop.permute.xlu0 %1690
  %v1693 = vmul.f32 %v1687, %v1691
  %1695 = vrot.lane.b32.xlu0 %v1693, 32
  %v1696 = vpop.permute.xlu0 %1695
  %v1698 = vadd.f32 %v1688, %v1696
  %v1699 = vtanh.pop %v1698
  %1701 = vrot.lane.b32.xlu0 %v1699, 64
  %v1702 = vpop.permute.xlu0 %1701
  %v1704 = vmul.f32 %v1687, %v1702
  %v1705 = vpack.c.bf16 %v1704, %v1704
  %1707 = vrot.lane.b32.xlu0 %v1705, 32
  %v1708 = vpop.permute.xlu0 %1707
  %v1710 = vsel %vm1351, %v1708, 0
  %1712 = vmatpush.bf16.msra.mxu0 0
  %1713 = vmatpush.bf16.msra.mxu0 0
  %1714 = vmatpush.bf16.msra.mxu0 0
  %1715 = vmatpush.bf16.msra.mxu0 0
  %1716 = vmatpush.bf16.msra.mxu0 0
  %1717 = vmatpush.bf16.msra.mxu0 0
  %1718 = vmatpush.bf16.msra.mxu0 %v28
  %1719 = vmatpush.bf16.msra.mxu0 %v27
  %1720 = vmatmul.bf16.gmra.mxu0 %v1710
  %v1721 = vpop.f32.mrf.mxu0
  %v1722 = vadd.f32 0.0, %v1721
  %v1723 = vpop.f32.mrf.mxu0
  %1724 = vdwg.mxu0
  %v1725 = vadd.f32 %v1415, %v1722
  %v1726 = vtanh.pop %v1725
  %v1727 = vmul.f32 %v1726, %v1420
  %v1728 = vadd.f32 %v1727, %v1421
  %v1729 = vmul.f32 %v1728, %v1698
  %1731 = vrot.lane.b32.xlu0 %v1728, 64
  %v1732 = vpop.permute.xlu0 %1731
  %v1734 = vmul.f32 %v1728, %v1732
  %1736 = vrot.lane.b32.xlu0 %v1734, 32
  %v1737 = vpop.permute.xlu0 %1736
  %v1739 = vadd.f32 %v1729, %v1737
  %v1740 = vtanh.pop %v1739
  %1742 = vrot.lane.b32.xlu0 %v1740, 64
  %v1743 = vpop.permute.xlu0 %1742
  %v1745 = vmul.f32 %v1728, %v1743
  %1747 = vrot.lane.b32.xlu0 %v1745, 32
  %v1748 = vpop.permute.xlu0 %1747
  %v1749 = vsel %vm1351, %v1748, 0
  %1751 = vmatpush.msra.mxu0 0.0
  %1752 = vmatpush.msra.mxu0 0.0
  %1753 = vmatpush.msra.mxu0 0.0
  %1754 = vmatpush.msra.mxu0 0.0
  %1755 = vmatpush.msra.mxu0 0.0
  %1756 = vmatpush.msra.mxu0 0.0
  %1757 = vmatpush.msra.mxu0 0.0
  %1758 = vmatpush.msra.mxu0 0.0
  %1759 = vmatpush.msra.mxu0 0.0
  %1760 = vmatpush.msra.mxu0 0.0
  %1761 = vmatpush.msra.mxu0 0.0
  %1762 = vmatpush.msra.mxu0 0.0
  %1763 = vmatpush.msra.mxu0 %v32
  %1764 = vmatpush.msra.mxu0 %v31
  %1765 = vmatpush.msra.mxu0 %v30
  %1766 = vmatpush.msra.mxu0 %v29
  %1767 = vmatmul.f32.gmra.mxu0 %v1749
  %v1768 = vpop.f32.mrf.mxu0
  %v1769 = vadd.f32 0.0, %v1768
  %1770 = vdwg.mxu0
  %v1771 = vperm.slane %v18, 0
  %v1772 = vadd.f32 %v1769, %v1771
  %vm1773 = vcmask 23552
  %v1774 = vsel %vm1773, %v1772, -inf
  %1775 = vmax.xlane.f32.xlu0 %v1774
  %v1776 = vpop.xlane.xlu0 %1775
  %v1777 = vsub.f32 %v1772, %v1776
  %v1778 = vmul.f32 %v1777, 1.442695
  %v1779 = vpow.pop %v1778
  %v1780 = vsel %vm1773, %v1779, 0.0
  %1781 = vadd.xlane.f32.xlu0 %v1780
  %v1782 = vpop.xlane.xlu0 %1781
  %v1783 = vrcp.pop %v1782
  %v1784 = vmul.f32 %v1782, %v1783
  %v1785 = vsub.f32 1.0, %v1784
  %v1786 = vmul.f32 %v1783, %v1785
  %v1787 = vadd.f32 %v1783, %v1786
  %vm1788 = vweird.f32 %v1782
  %vm1789 = vweird.f32 %v1783
  %vm1790 = vmor %vm1788, %vm1789
  %v1791 = vsel %vm1790, %v1783, %v1787
  %v1792 = vand.u32 2147483647, %v1782
  %vm1793 = vcmp.eq.f32.partialorder %v1792, 8.507059e+37
  %v1794 = vand.u32 %v1782, 2147483648
  %v1795 = vor.u32 1.1754944e-38, %v1794
  %v1796 = vsel %vm1793, %v1795, %v1791
  %v1797 = vmul.f32 %v1779, %v1796
  %1798 = vst.msk [vmem:[%s3] sm:$0xff] %vm1773, %v1797
  // Predicated region
  $region14: #{t2v_lstm_forward.1} parent=0 // pred_check
    _
  $region15: #{t2v_lstm_forward.1} parent=0 // pred_check_branch
    %1800 = sbr.rel (0) target = $region17
  $region16: #{t2v_lstm_forward.1} parent=0 // pred_region
    _
  $region17: #{t2v_lstm_forward.1} parent=0 // pred_fallthru
    _
  // Predicated region
  $region18: #{t2v_lstm_forward.1} parent=0 // pred_check
    _
  $region19: #{t2v_lstm_forward.1} parent=0 // pred_check_branch
    %1802 = sbr.rel (0) target = $region21
  $region20: #{t2v_lstm_forward.1} parent=0 // pred_region
    _
  $region21: #{t2v_lstm_forward.1} parent=0 // pred_fallthru
    _

</llo_original>
